<compile_context>
chip_gen: v7x
topology: tpu7x:2x2x1
jax: 0.10.0
libtpu: 0.0.40
codegen_flags: <defaults>
</compile_context>

<pallas_src>
import functools

import jax
import jax.numpy as jnp
from jax.experimental import pallas as pl
from jax.experimental.pallas import tpu as pltpu

D_IN, D_H1, D_H2, D_OUT = 128, 256, 512, 784
D_OUT_PAD = 896  # 7 * 128: lane-dense output tile


def _round_up(n, m):
    return (n + m - 1) // m * m


def generator_kernel(x_ref, w1_ref, b1_ref, w2_ref, b2_ref, w3_ref, b3_ref,
                     o_ref):
    # layer1: fc (bf16 MXU inputs, f32 accumulation) + LeakyReLU(0.2)
    h1 = jnp.dot(x_ref[...], w1_ref[...],
                 preferred_element_type=jnp.float32) + b1_ref[...]
    h1 = jnp.maximum(h1, 0.2 * h1)

    # layer2: fc + LeakyReLU(0.2)
    h2 = jnp.dot(h1.astype(jnp.bfloat16), w2_ref[...],
                 preferred_element_type=jnp.float32) + b2_ref[...]
    h2 = jnp.maximum(h2, 0.2 * h2)

    # layer3: fc + Tanh (output feature dim padded to 896 lanes)
    h3 = jnp.dot(h2.astype(jnp.bfloat16), w3_ref[...],
                 preferred_element_type=jnp.float32) + b3_ref[...]
    o_ref[...] = jnp.tanh(h3)


def prepare_params(params):
    """One-time param prep (outside the jitted hot path):
    pad layer-3 output features 784 -> 896 (zero columns, sliced off after the
    kernel) and cast weights to bf16 for the MXU.  Biases stay f32 (added
    after the f32-accumulated dot)."""
    w1, b1, w2, b2, w3, b3 = params
    w3p = jnp.pad(w3, ((0, 0), (0, D_OUT_PAD - D_OUT)))
    b3p = jnp.pad(b3, ((0, 0), (0, D_OUT_PAD - D_OUT)))
    return (w1.astype(jnp.bfloat16), b1.astype(jnp.float32),
            w2.astype(jnp.bfloat16), b2.astype(jnp.float32),
            w3p.astype(jnp.bfloat16), b3p.astype(jnp.float32))


@functools.partial(jax.jit, static_argnames=("bm",))
def generator_forward(x, prepared_params, *, bm=None):
    """x: (B, 128) float32 -> (B, 784) float32.

    prepared_params must come from prepare_params()."""
    w1, b1, w2, b2, w3, b3 = prepared_params
    B = x.shape[0]

    # Adaptive batch tile (always a multiple of 16 for bf16 sublane packing):
    #  * tiny B   : whole (padded) batch in one block
    #  * mid B    : split into >= 2 tiles so the "parallel" batch axis shards
    #               across v7x's 2 TensorCores
    #  * large B  : 512-row tiles; 1024 for B >= 2048 (amortizes the ~0.35 us
    #               per-step overhead on v5e/v6e, still >= 2 grid steps)
    if bm is None:
        if B >= 2048:
            bm = 1024
        elif B >= 1024:
            bm = 512
        elif B >= 16:
            bm = min(512, _round_up(pl.cdiv(B, 2), 16))
        else:
            bm = _round_up(max(B, 16), 16)

    B_pad = _round_up(max(B, bm), bm)
    if B_pad != B:
        x = jnp.pad(x, ((0, B_pad - B), (0, 0)))
    x = x.astype(jnp.bfloat16)  # half-size x DMA; MXU consumes bf16 directly

    grid = (B_pad // bm,)

    def const(shape):
        # Constant-index (VMEM-resident) weights/biases: single-buffered.
        return pl.BlockSpec(shape, lambda i: (0, 0),
                            pipeline_mode=pl.Buffered(1))

    weight_bytes = (2 * (D_IN * D_H1 + D_H1 * D_H2 + D_H2 * D_OUT_PAD)
                    + 4 * (D_H1 + D_H2 + D_OUT_PAD))
    cost = pl.CostEstimate(
        flops=2 * B_pad * (D_IN * D_H1 + D_H1 * D_H2 + D_H2 * D_OUT_PAD),
        transcendentals=B_pad * D_OUT_PAD,
        bytes_accessed=(B_pad * D_IN * 2          # bf16 input
                        + B_pad * D_OUT_PAD * 4   # f32 output
                        + weight_bytes),
    )

    out = pl.pallas_call(
        generator_kernel,
        out_shape=jax.ShapeDtypeStruct((B_pad, D_OUT_PAD), jnp.float32),
        grid_spec=pltpu.PrefetchScalarGridSpec(
            num_scalar_prefetch=0,
            grid=grid,
            in_specs=[
                pl.BlockSpec((bm, D_IN), lambda i: (i, 0)),        # x tile
                const((D_IN, D_H1)), const((1, D_H1)),             # layer1
                const((D_H1, D_H2)), const((1, D_H2)),             # layer2
                const((D_H2, D_OUT_PAD)), const((1, D_OUT_PAD)),   # layer3
            ],
            out_specs=pl.BlockSpec((bm, D_OUT_PAD), lambda i: (i, 0)),
        ),
        compiler_params=pltpu.CompilerParams(
            dimension_semantics=("parallel",)),
        cost_estimate=cost,
    )(x, w1, b1, w2, b2, w3, b3)

    return out[:B, :D_OUT]


def init_params(key):
    """Deterministic init mimicking PyTorch Linear default U(-1/sqrt(in), 1/sqrt(in))."""
    ks = jax.random.split(key, 6)

    def linear(kw, kb, fan_in, fan_out):
        bound = 1.0 / jnp.sqrt(fan_in)
        w = jax.random.uniform(kw, (fan_in, fan_out), jnp.float32, -bound, bound)
        b = jax.random.uniform(kb, (1, fan_out), jnp.float32, -bound, bound)
        return w, b

    w1, b1 = linear(ks[0], ks[1], D_IN, D_H1)
    w2, b2 = linear(ks[2], ks[3], D_H1, D_H2)
    w3, b3 = linear(ks[4], ks[5], D_H2, D_OUT)
    return (w1, b1, w2, b2, w3, b3)


def generator_ref(x, params):
    """Full-precision f32 reference (PyTorch-equivalent forward)."""
    w1, b1, w2, b2, w3, b3 = params
    h = x @ w1 + b1
    h = jnp.where(h > 0, h, 0.2 * h)
    h = h @ w2 + b2
    h = jnp.where(h > 0, h, 0.2 * h)
    return jnp.tanh(h @ w3 + b3)


if __name__ == "__main__":
    key = jax.random.PRNGKey(0)
    k_params, k_x1, k_x2 = jax.random.split(key, 3)

    params = init_params(k_params)
    pparams = prepare_params(params)

    # bf16 MXU inputs -> compare against the f32 reference at a bf16-appropriate
    # tolerance (outputs are tanh-bounded, so absolute tolerance is meaningful).
    TOL = 2e-2

    # 1) Small batch: whole (padded) batch as one block, batch padding 8 -> 16.
    x1 = jax.random.normal(k_x1, (8, D_IN), dtype=jnp.float32)
    out1 = jax.block_until_ready(generator_forward(x1, pparams))
    ref1 = generator_ref(x1, params)
    assert out1.shape == (8, D_OUT)
    assert jnp.allclose(out1, ref1, atol=TOL, rtol=0), "mismatch (B=8)"

    # 2) Multi-step grid path (adaptive bm -> 2 grid steps, batch 40 -> 64).
    x2 = jax.random.normal(k_x2, (40, D_IN), dtype=jnp.float32)
    out2 = jax.block_until_ready(generator_forward(x2, pparams))
    ref2 = generator_ref(x2, params)
    assert out2.shape == (40, D_OUT)
    assert jnp.allclose(out2, ref2, atol=TOL, rtol=0), "mismatch (B=40)"

    # 3) Explicit tile size (exercise the bm kwarg / more grid steps).
    out3 = jax.block_until_ready(generator_forward(x2, pparams, bm=16))
    assert out3.shape == (40, D_OUT)
    assert jnp.allclose(out3, ref2, atol=TOL, rtol=0), "mismatch (B=40, bm=16)"

    print("KERNEL_OK")
</pallas_src>

<mosaic_0001>
module attributes {stable_mosaic.version = 11 : i64} {
  func.func @generator_kernel(%arg0: i32, %arg1: memref<16x128xbf16, #tpu.memory_space<vmem>>, %arg2: memref<128x256xbf16, #tpu.memory_space<vmem>>, %arg3: memref<1x256xf32, #tpu.memory_space<vmem>>, %arg4: memref<256x512xbf16, #tpu.memory_space<vmem>>, %arg5: memref<1x512xf32, #tpu.memory_space<vmem>>, %arg6: memref<512x896xbf16, #tpu.memory_space<vmem>>, %arg7: memref<1x896xf32, #tpu.memory_space<vmem>>, %arg8: memref<16x896xf32, #tpu.memory_space<vmem>>) attributes {dimension_semantics = [#tpu.dimension_semantics<parallel>], iteration_bounds = array<i64: 1>, scalar_prefetch = 0 : i64, scratch_operands = 0 : i64, tpu.core_type = #tpu.core_type<tc>, window_params = [{transform_indices = @transform_0, window_bounds = array<i64: 16, 128>}, {pipeline_mode = #tpu.pipeline_mode<synchronous>, transform_indices = @transform_1, window_bounds = array<i64: 128, 256>}, {pipeline_mode = #tpu.pipeline_mode<synchronous>, transform_indices = @transform_2, window_bounds = array<i64: 1, 256>}, {pipeline_mode = #tpu.pipeline_mode<synchronous>, transform_indices = @transform_3, window_bounds = array<i64: 256, 512>}, {pipeline_mode = #tpu.pipeline_mode<synchronous>, transform_indices = @transform_4, window_bounds = array<i64: 1, 512>}, {pipeline_mode = #tpu.pipeline_mode<synchronous>, transform_indices = @transform_5, window_bounds = array<i64: 512, 896>}, {pipeline_mode = #tpu.pipeline_mode<synchronous>, transform_indices = @transform_6, window_bounds = array<i64: 1, 896>}, {transform_indices = @transform_7, window_bounds = array<i64: 16, 896>}]} {
    %c0 = arith.constant 0 : index
    %c0_0 = arith.constant 0 : index
    %0 = vector.load %arg1[%c0, %c0_0] : memref<16x128xbf16, #tpu.memory_space<vmem>>, vector<16x128xbf16>
    %c0_1 = arith.constant 0 : index
    %c0_2 = arith.constant 0 : index
    %1 = vector.load %arg2[%c0_1, %c0_2] : memref<128x256xbf16, #tpu.memory_space<vmem>>, vector<128x256xbf16>
    %cst = arith.constant dense<0.000000e+00> : vector<16x256xf32>
    %2 = tpu.matmul %0, %1, %cst {dimension_numbers = #tpu.dot_dimension_numbers<[1], [0], [0], [1], [0, 0, 1, 1], [], []>} : vector<16x128xbf16>, vector<128x256xbf16>, vector<16x256xf32> -> vector<16x256xf32>
    %c0_3 = arith.constant 0 : index
    %c0_4 = arith.constant 0 : index
    %3 = vector.load %arg3[%c0_3, %c0_4] : memref<1x256xf32, #tpu.memory_space<vmem>>, vector<1x256xf32>
    %4 = vector.broadcast %3 : vector<1x256xf32> to vector<16x256xf32>
    %5 = arith.addf %2, %4 : vector<16x256xf32>
    %cst_5 = arith.constant 2.000000e-01 : f32
    %6 = vector.broadcast %cst_5 : f32 to vector<16x256xf32>
    %7 = arith.mulf %6, %5 : vector<16x256xf32>
    %8 = arith.maximumf %5, %7 : vector<16x256xf32>
    %9 = arith.truncf %8 : vector<16x256xf32> to vector<16x256xbf16>
    %c0_6 = arith.constant 0 : index
    %c0_7 = arith.constant 0 : index
    %10 = vector.load %arg4[%c0_6, %c0_7] : memref<256x512xbf16, #tpu.memory_space<vmem>>, vector<256x512xbf16>
    %cst_8 = arith.constant dense<0.000000e+00> : vector<16x512xf32>
    %11 = tpu.matmul %9, %10, %cst_8 {dimension_numbers = #tpu.dot_dimension_numbers<[1], [0], [0], [1], [0, 0, 1, 1], [], []>} : vector<16x256xbf16>, vector<256x512xbf16>, vector<16x512xf32> -> vector<16x512xf32>
    %c0_9 = arith.constant 0 : index
    %c0_10 = arith.constant 0 : index
    %12 = vector.load %arg5[%c0_9, %c0_10] : memref<1x512xf32, #tpu.memory_space<vmem>>, vector<1x512xf32>
    %13 = vector.broadcast %12 : vector<1x512xf32> to vector<16x512xf32>
    %14 = arith.addf %11, %13 : vector<16x512xf32>
    %cst_11 = arith.constant 2.000000e-01 : f32
    %15 = vector.broadcast %cst_11 : f32 to vector<16x512xf32>
    %16 = arith.mulf %15, %14 : vector<16x512xf32>
    %17 = arith.maximumf %14, %16 : vector<16x512xf32>
    %18 = arith.truncf %17 : vector<16x512xf32> to vector<16x512xbf16>
    %c0_12 = arith.constant 0 : index
    %c0_13 = arith.constant 0 : index
    %19 = vector.load %arg6[%c0_12, %c0_13] : memref<512x896xbf16, #tpu.memory_space<vmem>>, vector<512x896xbf16>
    %cst_14 = arith.constant dense<0.000000e+00> : vector<16x896xf32>
    %20 = tpu.matmul %18, %19, %cst_14 {dimension_numbers = #tpu.dot_dimension_numbers<[1], [0], [0], [1], [0, 0, 1, 1], [], []>} : vector<16x512xbf16>, vector<512x896xbf16>, vector<16x896xf32> -> vector<16x896xf32>
    %c0_15 = arith.constant 0 : index
    %c0_16 = arith.constant 0 : index
    %21 = vector.load %arg7[%c0_15, %c0_16] : memref<1x896xf32, #tpu.memory_space<vmem>>, vector<1x896xf32>
    %22 = vector.broadcast %21 : vector<1x896xf32> to vector<16x896xf32>
    %23 = arith.addf %20, %22 : vector<16x896xf32>
    %24 = math.tanh %23 : vector<16x896xf32>
    %c0_17 = arith.constant 0 : index
    %c0_18 = arith.constant 0 : index
    %25 = vector.load %arg8[%c0_17, %c0_18] : memref<16x896xf32, #tpu.memory_space<vmem>>, vector<16x896xf32>
    tpu.vector_store %arg8[%c0_17, %c0_18], %24 {strides = array<i32>} : memref<16x896xf32, #tpu.memory_space<vmem>>, vector<16x896xf32>,
    return
  }
  func.func @transform_0(%arg0: i32) -> (i32, i32) {
    %c0_i32 = arith.constant 0 : i32
    %c0_i32_0 = arith.constant 0 : i32
    return %arg0, %c0_i32 : i32, i32
  }
  func.func @transform_1(%arg0: i32) -> (i32, i32) {
    %c0_i32 = arith.constant 0 : i32
    %c0_i32_0 = arith.constant 0 : i32
    %c0_i32_1 = arith.constant 0 : i32
    return %c0_i32, %c0_i32_0 : i32, i32
  }
  func.func @transform_2(%arg0: i32) -> (i32, i32) {
    %c0_i32 = arith.constant 0 : i32
    %c0_i32_0 = arith.constant 0 : i32
    %c0_i32_1 = arith.constant 0 : i32
    return %c0_i32, %c0_i32_0 : i32, i32
  }
  func.func @transform_3(%arg0: i32) -> (i32, i32) {
    %c0_i32 = arith.constant 0 : i32
    %c0_i32_0 = arith.constant 0 : i32
    %c0_i32_1 = arith.constant 0 : i32
    return %c0_i32, %c0_i32_0 : i32, i32
  }
  func.func @transform_4(%arg0: i32) -> (i32, i32) {
    %c0_i32 = arith.constant 0 : i32
    %c0_i32_0 = arith.constant 0 : i32
    %c0_i32_1 = arith.constant 0 : i32
    return %c0_i32, %c0_i32_0 : i32, i32
  }
  func.func @transform_5(%arg0: i32) -> (i32, i32) {
    %c0_i32 = arith.constant 0 : i32
    %c0_i32_0 = arith.constant 0 : i32
    %c0_i32_1 = arith.constant 0 : i32
    return %c0_i32, %c0_i32_0 : i32, i32
  }
  func.func @transform_6(%arg0: i32) -> (i32, i32) {
    %c0_i32 = arith.constant 0 : i32
    %c0_i32_0 = arith.constant 0 : i32
    %c0_i32_1 = arith.constant 0 : i32
    return %c0_i32, %c0_i32_0 : i32, i32
  }
  func.func @transform_7(%arg0: i32) -> (i32, i32) {
    %c0_i32 = arith.constant 0 : i32
    %c0_i32_0 = arith.constant 0 : i32
    return %arg0, %c0_i32 : i32, i32
  }
}

</mosaic_0001>

<llo_original>
// kernel: generator_forward.1
$region0: #{generator_forward.1}
  #allocation0 [shape = 'u32[]', space=smem, size = 0x4, offset = 0x4, fixed_abs, tag = 'smem constant byte address 0x4 - core index']
  #allocation1 [shape = 'u32[144,128]{1,0:T(1,128)}', space=vmem, size = 0x12000, scoped, tag = 'internal scratch']
  %s0 = inlined_call_operand.vmem [shape: bf16[16,128], index: 0, kind: input, shape index: {}]
  %s1 = inlined_call_operand.hbm [shape: bf16[128,256], index: 1, kind: input, shape index: {}]
  %s2 = inlined_call_operand.vmem [shape: f32[1,256], index: 2, kind: input, shape index: {}]
  %s3 = inlined_call_operand.hbm [shape: bf16[256,512], index: 3, kind: input, shape index: {}]
  %s4 = inlined_call_operand.vmem [shape: f32[1,512], index: 4, kind: input, shape index: {}]
  %s5 = inlined_call_operand.hbm [shape: bf16[512,896], index: 5, kind: input, shape index: {}]
  %s6 = inlined_call_operand.vmem [shape: f32[1,896], index: 6, kind: input, shape index: {}]
  %s7 = inlined_call_operand.vmem [shape: f32[16,896], index: 7, kind: output, shape index: {}]
  %s8 = sld [smem:[#allocation0]]
  $region50: #{generator_forward.1} parent=0
    _
  %s10 = ssub.s32 1, %s8
  %s11 = scalar_select 0, %s10, %s8
  $region1: #{generator_forward.1} parent=0
    #allocation2 [shape = 'u8[65536]{0}', space=vmem, size = 0x10000, scoped, tag = 'input window, operand 1, single buffered']
    #allocation3 [shape = 's32[1]{0}', space=sflag, size = 0x4, scoped, tag = 'scoped memory for generator_forward.1']
    #allocation4 [shape = 'u8[262144]{0}', space=vmem, size = 0x40000, scoped, tag = 'input window, operand 3, single buffered']
    #allocation5 [shape = 's32[1]{0}', space=sflag, size = 0x4, scoped, tag = 'scoped memory for generator_forward.1']
    #allocation6 [shape = 'u8[917504]{0}', space=vmem, size = 0xe0000, scoped, tag = 'input window, operand 5, single buffered']
    %12 = vsyncpa [#allocation3], 0
    %13 = vsyncpa [#allocation5], 0
    // Predicated region
    $region2: #{generator_forward.1} parent=1 // pred_check
      _
    $region3: #{generator_forward.1} parent=1 // pred_check_branch
      %15 = sbr.rel (0) target = $region5
    $region4: #{generator_forward.1} parent=1 // pred_region
      _
    $region5: #{generator_forward.1} parent=1 // pred_fallthru
      _
    // Predicated region
    $region6: #{generator_forward.1} parent=1 // pred_check
      _
    $region7: #{generator_forward.1} parent=1 // pred_check_branch
      %17 = sbr.rel (0) target = $region9
    $region8: #{generator_forward.1} parent=1 // pred_region
      %s19 = ssub.s32 2048, 2048
      %20 = vsyncadd [#allocation3], %s19
      %s21 = sshll.u32 [#allocation2], 4
      %s22 = int_to_ptr.vmem [resolvable:$true] %s21
      %27 = dma.hbm_to_vmem [thread:$0]  %s1, 2048, %s22, [#allocation3], 128, 128, 8
    $region9: #{generator_forward.1} parent=1 // pred_fallthru
      _
    // Predicated region
    $region10: #{generator_forward.1} parent=1 // pred_check
      _
    $region11: #{generator_forward.1} parent=1 // pred_check_branch
      %29 = sbr.rel (0) target = $region13
    $region12: #{generator_forward.1} parent=1 // pred_region
      _
    $region13: #{generator_forward.1} parent=1 // pred_fallthru
      _
    // Predicated region
    $region14: #{generator_forward.1} parent=1 // pred_check
      _
    $region15: #{generator_forward.1} parent=1 // pred_check_branch
      %31 = sbr.rel (0) target = $region17
    $region16: #{generator_forward.1} parent=1 // pred_region
      %s33 = ssub.s32 8192, 8192
      %34 = vsyncadd [#allocation5], %s33
      %s35 = sshll.u32 [#allocation4], 4
      %s36 = int_to_ptr.vmem [resolvable:$true] %s35
      %41 = dma.hbm_to_vmem [thread:$0]  %s3, 8192, %s36, [#allocation5], 256, 256, 16
    $region17: #{generator_forward.1} parent=1 // pred_fallthru
      _
    // Predicated region
    $region18: #{generator_forward.1} parent=1 // pred_check
      _
    $region19: #{generator_forward.1} parent=1 // pred_check_branch
      %43 = sbr.rel (0) target = $region21
    $region20: #{generator_forward.1} parent=1 // pred_region
      _
    $region21: #{generator_forward.1} parent=1 // pred_fallthru
      _
    // Predicated region
    $region22: #{generator_forward.1} parent=1 // pred_check
      _
    $region23: #{generator_forward.1} parent=1 // pred_check_branch
      %45 = sbr.rel (0) target = $region25
    $region24: #{generator_forward.1} parent=1 // pred_region
      %s47 = ssub.s32 28672, 28672
      %48 = vsyncadd [#allocation5], %s47
      %s49 = sshll.u32 [#allocation6], 4
      %s50 = int_to_ptr.vmem [resolvable:$true] %s49
      %55 = dma.hbm_to_vmem [thread:$0]  %s5, 28672, %s50, [#allocation5], 448, 448, 28
    $region25: #{generator_forward.1} parent=1 // pred_fallthru
      _
    // Predicated region
    $region26: #{generator_forward.1} parent=1 // pred_check
      _
    $region27: #{generator_forward.1} parent=1 // pred_check_branch
      %57 = sbr.rel (0) target = $region29
    $region28: #{generator_forward.1} parent=1 // pred_region
      _
    $region29: #{generator_forward.1} parent=1 // pred_fallthru
      _
    // Predicated region
    $region30: #{generator_forward.1} parent=1 // pred_check
      _
    $region31: #{generator_forward.1} parent=1 // pred_check_branch
      %59 = sbr.rel (0) target = $region33
    $region32: #{generator_forward.1} parent=1 // pred_region
      %60 = dma.done [#allocation3], 2048
    $region33: #{generator_forward.1} parent=1 // pred_fallthru
      _
    // Predicated region
    $region34: #{generator_forward.1} parent=1 // pred_check
      _
    $region35: #{generator_forward.1} parent=1 // pred_check_branch
      %62 = sbr.rel (0) target = $region37
    $region36: #{generator_forward.1} parent=1 // pred_region
      %63 = dma.done [#allocation5], 8192
    $region37: #{generator_forward.1} parent=1 // pred_fallthru
      _
    // Predicated region
    $region38: #{generator_forward.1} parent=1 // pred_check
      _
    $region39: #{generator_forward.1} parent=1 // pred_check_branch
      %65 = sbr.rel (0) target = $region41
    $region40: #{generator_forward.1} parent=1 // pred_region
      %66 = dma.done [#allocation5], 28672
    $region41: #{generator_forward.1} parent=1 // pred_fallthru
      _
    %v68 = vld [vmem:[%s0] sm:$0xf]
    %v69 = vld [vmem:[%s0 + $0x4] sm:$0xf]
    %v70 = vld [vmem:[#allocation2] sm:$0xff]
    %v71 = vld [vmem:[#allocation2 + $0x8] sm:$0xff]
    %v72 = vld [vmem:[#allocation2 + $0x10] sm:$0xff]
    %v73 = vld [vmem:[#allocation2 + $0x18] sm:$0xff]
    %v74 = vld [vmem:[#allocation2 + $0x20] sm:$0xff]
    %v75 = vld [vmem:[#allocation2 + $0x28] sm:$0xff]
    %v76 = vld [vmem:[#allocation2 + $0x30] sm:$0xff]
    %v77 = vld [vmem:[#allocation2 + $0x38] sm:$0xff]
    %v78 = vld [vmem:[#allocation2 + $0x40] sm:$0xff]
    %v79 = vld [vmem:[#allocation2 + $0x48] sm:$0xff]
    %v80 = vld [vmem:[#allocation2 + $0x50] sm:$0xff]
    %v81 = vld [vmem:[#allocation2 + $0x58] sm:$0xff]
    %v82 = vld [vmem:[#allocation2 + $0x60] sm:$0xff]
    %v83 = vld [vmem:[#allocation2 + $0x68] sm:$0xff]
    %v84 = vld [vmem:[#allocation2 + $0x70] sm:$0xff]
    %v85 = vld [vmem:[#allocation2 + $0x78] sm:$0xff]
    %v86 = vld [vmem:[%s2] sm:$0x3]
    %v88 = vlaneseq
    %v89 = vshrl.u32 %v88, 7
    %v90 = vsub.s32 0, %v89
    %v91 = vrot.slane %v86, %v90
    %v92 = vlaneseq
    %v93 = vshrl.u32 %v92, 7
    %v94 = vsub.s32 1, %v93
    %v95 = vrot.slane %v86, %v94
    %v100 = vunpack.c.l.b16 %v68
    %v101 = vunpack.c.l.b16 %v69
    %v102 = vpack.c.b16 %v101, %v100
    %v120 = vunpack.c.l.b16 %v70
    %v121 = vunpack.c.h.b16 %v70
    %v122 = vunpack.c.l.b16 %v71
    %v123 = vunpack.c.h.b16 %v71
    %v124 = vunpack.c.l.b16 %v72
    %v125 = vunpack.c.h.b16 %v72
    %v126 = vunpack.c.l.b16 %v73
    %v127 = vunpack.c.h.b16 %v73
    %v128 = vunpack.c.l.b16 %v74
    %v129 = vunpack.c.h.b16 %v74
    %v130 = vunpack.c.l.b16 %v75
    %v131 = vunpack.c.h.b16 %v75
    %v132 = vunpack.c.l.b16 %v76
    %v133 = vunpack.c.h.b16 %v76
    %v134 = vunpack.c.l.b16 %v77
    %v135 = vunpack.c.h.b16 %v77
    %v136 = vunpack.c.l.b16 %v78
    %v137 = vunpack.c.h.b16 %v78
    %v138 = vunpack.c.l.b16 %v79
    %v139 = vunpack.c.h.b16 %v79
    %v140 = vunpack.c.l.b16 %v80
    %v141 = vunpack.c.h.b16 %v80
    %v142 = vunpack.c.l.b16 %v81
    %v143 = vunpack.c.h.b16 %v81
    %v144 = vunpack.c.l.b16 %v82
    %v145 = vunpack.c.h.b16 %v82
    %v146 = vunpack.c.l.b16 %v83
    %v147 = vunpack.c.h.b16 %v83
    %v148 = vunpack.c.l.b16 %v84
    %v149 = vunpack.c.h.b16 %v84
    %v150 = vunpack.c.l.b16 %v85
    %v151 = vunpack.c.h.b16 %v85
    %v152 = vpack.c.b16 %v122, %v120
    %v153 = vpack.c.b16 %v123, %v121
    %v154 = vpack.c.b16 %v126, %v124
    %v155 = vpack.c.b16 %v127, %v125
    %v156 = vpack.c.b16 %v130, %v128
    %v157 = vpack.c.b16 %v131, %v129
    %v158 = vpack.c.b16 %v134, %v132
    %v159 = vpack.c.b16 %v135, %v133
    %v160 = vpack.c.b16 %v138, %v136
    %v161 = vpack.c.b16 %v139, %v137
    %v162 = vpack.c.b16 %v142, %v140
    %v163 = vpack.c.b16 %v143, %v141
    %v164 = vpack.c.b16 %v146, %v144
    %v165 = vpack.c.b16 %v147, %v145
    %v166 = vpack.c.b16 %v150, %v148
    %v167 = vpack.c.b16 %v151, %v149
    %184 = vmatprep.subr.bf16.mxu0 %v153
    %185 = vmatpush1.bf16.msra.mxu0 %v152
    %186 = vmatprep.subr.bf16.mxu0 %v155
    %187 = vmatpush1.bf16.msra.mxu0 %v154
    %188 = vmatprep.subr.bf16.mxu0 %v157
    %189 = vmatpush1.bf16.msra.mxu0 %v156
    %190 = vmatprep.subr.bf16.mxu0 %v159
    %191 = vmatpush1.bf16.msra.mxu0 %v158
    %192 = vmatprep.subr.bf16.mxu0 %v161
    %193 = vmatpush1.bf16.msra.mxu0 %v160
    %194 = vmatprep.subr.bf16.mxu0 %v163
    %195 = vmatpush1.bf16.msra.mxu0 %v162
    %196 = vmatprep.subr.bf16.mxu0 %v165
    %197 = vmatpush1.bf16.msra.mxu0 %v164
    %198 = vmatprep.subr.bf16.mxu0 %v167
    %199 = vmatpush1.bf16.msra.mxu0 %v166
    %200 = vmatprep.subr.bf16.mxu0 0
    %201 = vmatpush1.bf16.msra.mxu0 0
    %202 = vmatprep.subr.bf16.mxu0 0
    %203 = vmatpush1.bf16.msra.mxu0 0
    %204 = vmatprep.subr.bf16.mxu0 0
    %205 = vmatpush1.bf16.msra.mxu0 0
    %206 = vmatprep.subr.bf16.mxu0 0
    %207 = vmatpush1.bf16.msra.mxu0 0
    %208 = vmatprep.subr.bf16.mxu0 0
    %209 = vmatpush1.bf16.msra.mxu0 0
    %210 = vmatprep.subr.bf16.mxu0 0
    %211 = vmatpush1.bf16.msra.mxu0 0
    %212 = vmatprep.subr.bf16.mxu0 0
    %213 = vmatpush1.bf16.msra.mxu0 0
    %214 = vmatprep.subr.bf16.mxu0 0
    %215 = vmatpush1.bf16.msra.mxu0 0
    %216 = vmatprep.mubr.bf16.mxu0 0
    %217 = vmatmul.mubr.bf16.gmra.mrb[0].mxu0 %v102
    %v218 = vpop.f32.mrb[0].mxu0
    %v219 = vadd.f32 %v91, %v218
    %v220 = vpop.f32.mrb[0].mxu0
    %v221 = vadd.f32 %v95, %v220
    %v222 = vpop.f32.mrb[0].mxu0
    %v223 = vadd.f32 %v91, %v222
    %v224 = vpop.f32.mrb[0].mxu0
    %v225 = vadd.f32 %v95, %v224
    %226 = vdwg.mxu0
    %v227 = vmul.f32 %v219, 0.2
    %v228 = vmul.f32 %v221, 0.2
    %v229 = vmul.f32 %v223, 0.2
    %v230 = vmul.f32 %v225, 0.2
    %v231 = vmax.f32 %v219, %v227
    %v232 = vmax.f32 %v221, %v228
    %v233 = vmax.f32 %v223, %v229
    %v234 = vmax.f32 %v225, %v230
    %v235 = vpack.c.bf16 %v233, %v231
    %v236 = vpack.c.bf16 %v234, %v232
    %v237 = vld [vmem:[#allocation4] sm:$0xff]
    %v238 = vld [vmem:[#allocation4 + $0x8] sm:$0xff]
    %v239 = vld [vmem:[#allocation4 + $0x10] sm:$0xff]
    %v240 = vld [vmem:[#allocation4 + $0x18] sm:$0xff]
    %v241 = vld [vmem:[#allocation4 + $0x20] sm:$0xff]
    %v242 = vld [vmem:[#allocation4 + $0x28] sm:$0xff]
    %v243 = vld [vmem:[#allocation4 + $0x30] sm:$0xff]
    %v244 = vld [vmem:[#allocation4 + $0x38] sm:$0xff]
    %v245 = vld [vmem:[#allocation4 + $0x40] sm:$0xff]
    %v246 = vld [vmem:[#allocation4 + $0x48] sm:$0xff]
    %v247 = vld [vmem:[#allocation4 + $0x50] sm:$0xff]
    %v248 = vld [vmem:[#allocation4 + $0x58] sm:$0xff]
    %v249 = vld [vmem:[#allocation4 + $0x60] sm:$0xff]
    %v250 = vld [vmem:[#allocation4 + $0x68] sm:$0xff]
    %v251 = vld [vmem:[#allocation4 + $0x70] sm:$0xff]
    %v252 = vld [vmem:[#allocation4 + $0x78] sm:$0xff]
    %v253 = vld [vmem:[#allocation4 + $0x80] sm:$0xff]
    %v254 = vld [vmem:[#allocation4 + $0x88] sm:$0xff]
    %v255 = vld [vmem:[#allocation4 + $0x90] sm:$0xff]
    %v256 = vld [vmem:[#allocation4 + $0x98] sm:$0xff]
    %v257 = vld [vmem:[#allocation4 + $0xa0] sm:$0xff]
    %v258 = vld [vmem:[#allocation4 + $0xa8] sm:$0xff]
    %v259 = vld [vmem:[#allocation4 + $0xb0] sm:$0xff]
    %v260 = vld [vmem:[#allocation4 + $0xb8] sm:$0xff]
    %v261 = vld [vmem:[#allocation4 + $0xc0] sm:$0xff]
    %v262 = vld [vmem:[#allocation4 + $0xc8] sm:$0xff]
    %v263 = vld [vmem:[#allocation4 + $0xd0] sm:$0xff]
    %v264 = vld [vmem:[#allocation4 + $0xd8] sm:$0xff]
    %v265 = vld [vmem:[#allocation4 + $0xe0] sm:$0xff]
    %v266 = vld [vmem:[#allocation4 + $0xe8] sm:$0xff]
    %v267 = vld [vmem:[#allocation4 + $0xf0] sm:$0xff]
    %v268 = vld [vmem:[#allocation4 + $0xf8] sm:$0xff]
    %v269 = vld [vmem:[#allocation4 + $0x100] sm:$0xff]
    %v270 = vld [vmem:[#allocation4 + $0x108] sm:$0xff]
    %v271 = vld [vmem:[#allocation4 + $0x110] sm:$0xff]
    %v272 = vld [vmem:[#allocation4 + $0x118] sm:$0xff]
    %v273 = vld [vmem:[#allocation4 + $0x120] sm:$0xff]
    %v274 = vld [vmem:[#allocation4 + $0x128] sm:$0xff]
    %v275 = vld [vmem:[#allocation4 + $0x130] sm:$0xff]
    %v276 = vld [vmem:[#allocation4 + $0x138] sm:$0xff]
    %v277 = vld [vmem:[#allocation4 + $0x140] sm:$0xff]
    %v278 = vld [vmem:[#allocation4 + $0x148] sm:$0xff]
    %v279 = vld [vmem:[#allocation4 + $0x150] sm:$0xff]
    %v280 = vld [vmem:[#allocation4 + $0x158] sm:$0xff]
    %v281 = vld [vmem:[#allocation4 + $0x160] sm:$0xff]
    %v282 = vld [vmem:[#allocation4 + $0x168] sm:$0xff]
    %v283 = vld [vmem:[#allocation4 + $0x170] sm:$0xff]
    %v284 = vld [vmem:[#allocation4 + $0x178] sm:$0xff]
    %v285 = vld [vmem:[#allocation4 + $0x180] sm:$0xff]
    %v286 = vld [vmem:[#allocation4 + $0x188] sm:$0xff]
    %v287 = vld [vmem:[#allocation4 + $0x190] sm:$0xff]
    %v288 = vld [vmem:[#allocation4 + $0x198] sm:$0xff]
    %v289 = vld [vmem:[#allocation4 + $0x1a0] sm:$0xff]
    %v290 = vld [vmem:[#allocation4 + $0x1a8] sm:$0xff]
    %v291 = vld [vmem:[#allocation4 + $0x1b0] sm:$0xff]
    %v292 = vld [vmem:[#allocation4 + $0x1b8] sm:$0xff]
    %v293 = vld [vmem:[#allocation4 + $0x1c0] sm:$0xff]
    %v294 = vld [vmem:[#allocation4 + $0x1c8] sm:$0xff]
    %v295 = vld [vmem:[#allocation4 + $0x1d0] sm:$0xff]
    %v296 = vld [vmem:[#allocation4 + $0x1d8] sm:$0xff]
    %v297 = vld [vmem:[#allocation4 + $0x1e0] sm:$0xff]
    %v298 = vld [vmem:[#allocation4 + $0x1e8] sm:$0xff]
    %v299 = vld [vmem:[#allocation4 + $0x1f0] sm:$0xff]
    %v300 = vld [vmem:[#allocation4 + $0x1f8] sm:$0xff]
    %v301 = vld [vmem:[%s4] sm:$0xf]
    %v303 = vlaneseq
    %v304 = vshrl.u32 %v303, 7
    %v305 = vsub.s32 0, %v304
    %v306 = vrot.slane %v301, %v305
    %v307 = vlaneseq
    %v308 = vshrl.u32 %v307, 7
    %v309 = vsub.s32 1, %v308
    %v310 = vrot.slane %v301, %v309
    %v311 = vlaneseq
    %v312 = vshrl.u32 %v311, 7
    %v313 = vsub.s32 2, %v312
    %v314 = vrot.slane %v301, %v313
    %v315 = vlaneseq
    %v316 = vshrl.u32 %v315, 7
    %v317 = vsub.s32 3, %v316
    %v318 = vrot.slane %v301, %v317
    %v387 = vunpack.c.l.b16 %v237
    %v388 = vunpack.c.h.b16 %v237
    %v389 = vunpack.c.l.b16 %v238
    %v390 = vunpack.c.h.b16 %v238
    %v391 = vunpack.c.l.b16 %v239
    %v392 = vunpack.c.h.b16 %v239
    %v393 = vunpack.c.l.b16 %v240
    %v394 = vunpack.c.h.b16 %v240
    %v395 = vunpack.c.l.b16 %v241
    %v396 = vunpack.c.h.b16 %v241
    %v397 = vunpack.c.l.b16 %v242
    %v398 = vunpack.c.h.b16 %v242
    %v399 = vunpack.c.l.b16 %v243
    %v400 = vunpack.c.h.b16 %v243
    %v401 = vunpack.c.l.b16 %v244
    %v402 = vunpack.c.h.b16 %v244
    %v403 = vunpack.c.l.b16 %v245
    %v404 = vunpack.c.h.b16 %v245
    %v405 = vunpack.c.l.b16 %v246
    %v406 = vunpack.c.h.b16 %v246
    %v407 = vunpack.c.l.b16 %v247
    %v408 = vunpack.c.h.b16 %v247
    %v409 = vunpack.c.l.b16 %v248
    %v410 = vunpack.c.h.b16 %v248
    %v411 = vunpack.c.l.b16 %v249
    %v412 = vunpack.c.h.b16 %v249
    %v413 = vunpack.c.l.b16 %v250
    %v414 = vunpack.c.h.b16 %v250
    %v415 = vunpack.c.l.b16 %v251
    %v416 = vunpack.c.h.b16 %v251
    %v417 = vunpack.c.l.b16 %v252
    %v418 = vunpack.c.h.b16 %v252
    %v419 = vunpack.c.l.b16 %v253
    %v420 = vunpack.c.h.b16 %v253
    %v421 = vunpack.c.l.b16 %v254
    %v422 = vunpack.c.h.b16 %v254
    %v423 = vunpack.c.l.b16 %v255
    %v424 = vunpack.c.h.b16 %v255
    %v425 = vunpack.c.l.b16 %v256
    %v426 = vunpack.c.h.b16 %v256
    %v427 = vunpack.c.l.b16 %v257
    %v428 = vunpack.c.h.b16 %v257
    %v429 = vunpack.c.l.b16 %v258
    %v430 = vunpack.c.h.b16 %v258
    %v431 = vunpack.c.l.b16 %v259
    %v432 = vunpack.c.h.b16 %v259
    %v433 = vunpack.c.l.b16 %v260
    %v434 = vunpack.c.h.b16 %v260
    %v435 = vunpack.c.l.b16 %v261
    %v436 = vunpack.c.h.b16 %v261
    %v437 = vunpack.c.l.b16 %v262
    %v438 = vunpack.c.h.b16 %v262
    %v439 = vunpack.c.l.b16 %v263
    %v440 = vunpack.c.h.b16 %v263
    %v441 = vunpack.c.l.b16 %v264
    %v442 = vunpack.c.h.b16 %v264
    %v443 = vunpack.c.l.b16 %v265
    %v444 = vunpack.c.h.b16 %v265
    %v445 = vunpack.c.l.b16 %v266
    %v446 = vunpack.c.h.b16 %v266
    %v447 = vunpack.c.l.b16 %v267
    %v448 = vunpack.c.h.b16 %v267
    %v449 = vunpack.c.l.b16 %v268
    %v450 = vunpack.c.h.b16 %v268
    %v451 = vunpack.c.l.b16 %v269
    %v452 = vunpack.c.h.b16 %v269
    %v453 = vunpack.c.l.b16 %v270
    %v454 = vunpack.c.h.b16 %v270
    %v455 = vunpack.c.l.b16 %v271
    %v456 = vunpack.c.h.b16 %v271
    %v457 = vunpack.c.l.b16 %v272
    %v458 = vunpack.c.h.b16 %v272
    %v459 = vunpack.c.l.b16 %v273
    %v460 = vunpack.c.h.b16 %v273
    %v461 = vunpack.c.l.b16 %v274
    %v462 = vunpack.c.h.b16 %v274
    %v463 = vunpack.c.l.b16 %v275
    %v464 = vunpack.c.h.b16 %v275
    %v465 = vunpack.c.l.b16 %v276
    %v466 = vunpack.c.h.b16 %v276
    %v467 = vunpack.c.l.b16 %v277
    %v468 = vunpack.c.h.b16 %v277
    %v469 = vunpack.c.l.b16 %v278
    %v470 = vunpack.c.h.b16 %v278
    %v471 = vunpack.c.l.b16 %v279
    %v472 = vunpack.c.h.b16 %v279
    %v473 = vunpack.c.l.b16 %v280
    %v474 = vunpack.c.h.b16 %v280
    %v475 = vunpack.c.l.b16 %v281
    %v476 = vunpack.c.h.b16 %v281
    %v477 = vunpack.c.l.b16 %v282
    %v478 = vunpack.c.h.b16 %v282
    %v479 = vunpack.c.l.b16 %v283
    %v480 = vunpack.c.h.b16 %v283
    %v481 = vunpack.c.l.b16 %v284
    %v482 = vunpack.c.h.b16 %v284
    %v483 = vunpack.c.l.b16 %v285
    %v484 = vunpack.c.h.b16 %v285
    %v485 = vunpack.c.l.b16 %v286
    %v486 = vunpack.c.h.b16 %v286
    %v487 = vunpack.c.l.b16 %v287
    %v488 = vunpack.c.h.b16 %v287
    %v489 = vunpack.c.l.b16 %v288
    %v490 = vunpack.c.h.b16 %v288
    %v491 = vunpack.c.l.b16 %v289
    %v492 = vunpack.c.h.b16 %v289
    %v493 = vunpack.c.l.b16 %v290
    %v494 = vunpack.c.h.b16 %v290
    %v495 = vunpack.c.l.b16 %v291
    %v496 = vunpack.c.h.b16 %v291
    %v497 = vunpack.c.l.b16 %v292
    %v498 = vunpack.c.h.b16 %v292
    %v499 = vunpack.c.l.b16 %v293
    %v500 = vunpack.c.h.b16 %v293
    %v501 = vunpack.c.l.b16 %v294
    %v502 = vunpack.c.h.b16 %v294
    %v503 = vunpack.c.l.b16 %v295
    %v504 = vunpack.c.h.b16 %v295
    %v505 = vunpack.c.l.b16 %v296
    %v506 = vunpack.c.h.b16 %v296
    %v507 = vunpack.c.l.b16 %v297
    %v508 = vunpack.c.h.b16 %v297
    %v509 = vunpack.c.l.b16 %v298
    %v510 = vunpack.c.h.b16 %v298
    %v511 = vunpack.c.l.b16 %v299
    %v512 = vunpack.c.h.b16 %v299
    %v513 = vunpack.c.l.b16 %v300
    %v514 = vunpack.c.h.b16 %v300
    %v515 = vpack.c.b16 %v391, %v387
    %v516 = vpack.c.b16 %v392, %v388
    %v517 = vpack.c.b16 %v393, %v389
    %v518 = vpack.c.b16 %v394, %v390
    %v519 = vpack.c.b16 %v399, %v395
    %v520 = vpack.c.b16 %v400, %v396
    %v521 = vpack.c.b16 %v401, %v397
    %v522 = vpack.c.b16 %v402, %v398
    %v523 = vpack.c.b16 %v407, %v403
    %v524 = vpack.c.b16 %v408, %v404
    %v525 = vpack.c.b16 %v409, %v405
    %v526 = vpack.c.b16 %v410, %v406
    %v527 = vpack.c.b16 %v415, %v411
    %v528 = vpack.c.b16 %v416, %v412
    %v529 = vpack.c.b16 %v417, %v413
    %v530 = vpack.c.b16 %v418, %v414
    %v531 = vpack.c.b16 %v423, %v419
    %v532 = vpack.c.b16 %v424, %v420
    %v533 = vpack.c.b16 %v425, %v421
    %v534 = vpack.c.b16 %v426, %v422
    %v535 = vpack.c.b16 %v431, %v427
    %v536 = vpack.c.b16 %v432, %v428
    %v537 = vpack.c.b16 %v433, %v429
    %v538 = vpack.c.b16 %v434, %v430
    %v539 = vpack.c.b16 %v439, %v435
    %v540 = vpack.c.b16 %v440, %v436
    %v541 = vpack.c.b16 %v441, %v437
    %v542 = vpack.c.b16 %v442, %v438
    %v543 = vpack.c.b16 %v447, %v443
    %v544 = vpack.c.b16 %v448, %v444
    %v545 = vpack.c.b16 %v449, %v445
    %v546 = vpack.c.b16 %v450, %v446
    %v547 = vpack.c.b16 %v455, %v451
    %v548 = vpack.c.b16 %v456, %v452
    %v549 = vpack.c.b16 %v457, %v453
    %v550 = vpack.c.b16 %v458, %v454
    %v551 = vpack.c.b16 %v463, %v459
    %v552 = vpack.c.b16 %v464, %v460
    %v553 = vpack.c.b16 %v465, %v461
    %v554 = vpack.c.b16 %v466, %v462
    %v555 = vpack.c.b16 %v471, %v467
    %v556 = vpack.c.b16 %v472, %v468
    %v557 = vpack.c.b16 %v473, %v469
    %v558 = vpack.c.b16 %v474, %v470
    %v559 = vpack.c.b16 %v479, %v475
    %v560 = vpack.c.b16 %v480, %v476
    %v561 = vpack.c.b16 %v481, %v477
    %v562 = vpack.c.b16 %v482, %v478
    %v563 = vpack.c.b16 %v487, %v483
    %v564 = vpack.c.b16 %v488, %v484
    %v565 = vpack.c.b16 %v489, %v485
    %v566 = vpack.c.b16 %v490, %v486
    %v567 = vpack.c.b16 %v495, %v491
    %v568 = vpack.c.b16 %v496, %v492
    %v569 = vpack.c.b16 %v497, %v493
    %v570 = vpack.c.b16 %v498, %v494
    %v571 = vpack.c.b16 %v503, %v499
    %v572 = vpack.c.b16 %v504, %v500
    %v573 = vpack.c.b16 %v505, %v501
    %v574 = vpack.c.b16 %v506, %v502
    %v575 = vpack.c.b16 %v511, %v507
    %v576 = vpack.c.b16 %v512, %v508
    %v577 = vpack.c.b16 %v513, %v509
    %v578 = vpack.c.b16 %v514, %v510
    %643 = vmatprep.subr.bf16.mxu0 %v516
    %644 = vmatpush1.bf16.msra.mxu0 %v515
    %645 = vmatprep.subr.bf16.mxu0 %v520
    %646 = vmatpush1.bf16.msra.mxu0 %v519
    %647 = vmatprep.subr.bf16.mxu0 %v524
    %648 = vmatpush1.bf16.msra.mxu0 %v523
    %649 = vmatprep.subr.bf16.mxu0 %v528
    %650 = vmatpush1.bf16.msra.mxu0 %v527
    %651 = vmatprep.subr.bf16.mxu0 %v532
    %652 = vmatpush1.bf16.msra.mxu0 %v531
    %653 = vmatprep.subr.bf16.mxu0 %v536
    %654 = vmatpush1.bf16.msra.mxu0 %v535
    %655 = vmatprep.subr.bf16.mxu0 %v540
    %656 = vmatpush1.bf16.msra.mxu0 %v539
    %657 = vmatprep.subr.bf16.mxu0 %v544
    %658 = vmatpush1.bf16.msra.mxu0 %v543
    %659 = vmatprep.subr.bf16.mxu0 %v548
    %660 = vmatpush1.bf16.msra.mxu0 %v547
    %661 = vmatprep.subr.bf16.mxu0 %v552
    %662 = vmatpush1.bf16.msra.mxu0 %v551
    %663 = vmatprep.subr.bf16.mxu0 %v556
    %664 = vmatpush1.bf16.msra.mxu0 %v555
    %665 = vmatprep.subr.bf16.mxu0 %v560
    %666 = vmatpush1.bf16.msra.mxu0 %v559
    %667 = vmatprep.subr.bf16.mxu0 %v564
    %668 = vmatpush1.bf16.msra.mxu0 %v563
    %669 = vmatprep.subr.bf16.mxu0 %v568
    %670 = vmatpush1.bf16.msra.mxu0 %v567
    %671 = vmatprep.subr.bf16.mxu0 %v572
    %672 = vmatpush1.bf16.msra.mxu0 %v571
    %673 = vmatprep.subr.bf16.mxu0 %v576
    %674 = vmatpush1.bf16.msra.mxu0 %v575
    %675 = vmatprep.mubr.bf16.mxu0 %v236
    %676 = vmatmul.mubr.bf16.gmra.mrb[0].mxu0 %v235
    %v677 = vpop.f32.mrb[0].mxu0
    %v678 = vadd.f32 %v306, %v677
    %v679 = vpop.f32.mrb[0].mxu0
    %v680 = vadd.f32 %v310, %v679
    %v681 = vpop.f32.mrb[0].mxu0
    %v682 = vadd.f32 %v306, %v681
    %v683 = vpop.f32.mrb[0].mxu0
    %v684 = vadd.f32 %v310, %v683
    %685 = vdwg.mxu0
    %686 = vmatprep.subr.bf16.mxu0 %v518
    %687 = vmatpush1.bf16.msra.mxu0 %v517
    %688 = vmatprep.subr.bf16.mxu0 %v522
    %689 = vmatpush1.bf16.msra.mxu0 %v521
    %690 = vmatprep.subr.bf16.mxu0 %v526
    %691 = vmatpush1.bf16.msra.mxu0 %v525
    %692 = vmatprep.subr.bf16.mxu0 %v530
    %693 = vmatpush1.bf16.msra.mxu0 %v529
    %694 = vmatprep.subr.bf16.mxu0 %v534
    %695 = vmatpush1.bf16.msra.mxu0 %v533
    %696 = vmatprep.subr.bf16.mxu0 %v538
    %697 = vmatpush1.bf16.msra.mxu0 %v537
    %698 = vmatprep.subr.bf16.mxu0 %v542
    %699 = vmatpush1.bf16.msra.mxu0 %v541
    %700 = vmatprep.subr.bf16.mxu0 %v546
    %701 = vmatpush1.bf16.msra.mxu0 %v545
    %702 = vmatprep.subr.bf16.mxu0 %v550
    %703 = vmatpush1.bf16.msra.mxu0 %v549
    %704 = vmatprep.subr.bf16.mxu0 %v554
    %705 = vmatpush1.bf16.msra.mxu0 %v553
    %706 = vmatprep.subr.bf16.mxu0 %v558
    %707 = vmatpush1.bf16.msra.mxu0 %v557
    %708 = vmatprep.subr.bf16.mxu0 %v562
    %709 = vmatpush1.bf16.msra.mxu0 %v561
    %710 = vmatprep.subr.bf16.mxu0 %v566
    %711 = vmatpush1.bf16.msra.mxu0 %v565
    %712 = vmatprep.subr.bf16.mxu0 %v570
    %713 = vmatpush1.bf16.msra.mxu0 %v569
    %714 = vmatprep.subr.bf16.mxu0 %v574
    %715 = vmatpush1.bf16.msra.mxu0 %v573
    %716 = vmatprep.subr.bf16.mxu0 %v578
    %717 = vmatpush1.bf16.msra.mxu0 %v577
    %718 = vmatprep.mubr.bf16.mxu0 %v236
    %719 = vmatmul.mubr.bf16.gmra.mrb[0].mxu0 %v235
    %v720 = vpop.f32.mrb[0].mxu0
    %v721 = vadd.f32 %v314, %v720
    %v722 = vpop.f32.mrb[0].mxu0
    %v723 = vadd.f32 %v318, %v722
    %v724 = vpop.f32.mrb[0].mxu0
    %v725 = vadd.f32 %v314, %v724
    %v726 = vpop.f32.mrb[0].mxu0
    %v727 = vadd.f32 %v318, %v726
    %728 = vdwg.mxu0
    %v729 = vmul.f32 %v678, 0.2
    %v730 = vmul.f32 %v680, 0.2
    %v731 = vmul.f32 %v721, 0.2
    %v732 = vmul.f32 %v723, 0.2
    %v733 = vmul.f32 %v682, 0.2
    %v734 = vmul.f32 %v684, 0.2
    %v735 = vmul.f32 %v725, 0.2
    %v736 = vmul.f32 %v727, 0.2
    %v737 = vmax.f32 %v678, %v729
    %v738 = vmax.f32 %v680, %v730
    %v739 = vmax.f32 %v721, %v731
    %v740 = vmax.f32 %v723, %v732
    %v741 = vmax.f32 %v682, %v733
    %v742 = vmax.f32 %v684, %v734
    %v743 = vmax.f32 %v725, %v735
    %v744 = vmax.f32 %v727, %v736
    %v745 = vpack.c.bf16 %v741, %v737
    %v746 = vpack.c.bf16 %v742, %v738
    %v747 = vpack.c.bf16 %v743, %v739
    %v748 = vpack.c.bf16 %v744, %v740
    %v749 = vld [vmem:[#allocation6] sm:$0xff]
    %v750 = vld [vmem:[#allocation6 + $0x8] sm:$0xff]
    %v751 = vld [vmem:[#allocation6 + $0x10] sm:$0xff]
    %v752 = vld [vmem:[#allocation6 + $0x18] sm:$0xf]
    %v753 = vld [vmem:[#allocation6 + $0x1c] sm:$0xff]
    %v754 = vld [vmem:[#allocation6 + $0x24] sm:$0xff]
    %v755 = vld [vmem:[#allocation6 + $0x2c] sm:$0xff]
    %v756 = vld [vmem:[#allocation6 + $0x34] sm:$0xf]
    %v757 = vld [vmem:[#allocation6 + $0x38] sm:$0xff]
    %v758 = vld [vmem:[#allocation6 + $0x40] sm:$0xff]
    %v759 = vld [vmem:[#allocation6 + $0x48] sm:$0xff]
    %v760 = vld [vmem:[#allocation6 + $0x50] sm:$0xf]
    %v761 = vld [vmem:[#allocation6 + $0x54] sm:$0xff]
    %v762 = vld [vmem:[#allocation6 + $0x5c] sm:$0xff]
    %v763 = vld [vmem:[#allocation6 + $0x64] sm:$0xff]
    %v764 = vld [vmem:[#allocation6 + $0x6c] sm:$0xf]
    %v765 = vld [vmem:[#allocation6 + $0x70] sm:$0xff]
    %v766 = vld [vmem:[#allocation6 + $0x78] sm:$0xff]
    %v767 = vld [vmem:[#allocation6 + $0x80] sm:$0xff]
    %v768 = vld [vmem:[#allocation6 + $0x88] sm:$0xf]
    %v769 = vld [vmem:[#allocation6 + $0x8c] sm:$0xff]
    %v770 = vld [vmem:[#allocation6 + $0x94] sm:$0xff]
    %v771 = vld [vmem:[#allocation6 + $0x9c] sm:$0xff]
    %v772 = vld [vmem:[#allocation6 + $0xa4] sm:$0xf]
    %v773 = vld [vmem:[#allocation6 + $0xa8] sm:$0xff]
    %v774 = vld [vmem:[#allocation6 + $0xb0] sm:$0xff]
    %v775 = vld [vmem:[#allocation6 + $0xb8] sm:$0xff]
    %v776 = vld [vmem:[#allocation6 + $0xc0] sm:$0xf]
    %v777 = vld [vmem:[#allocation6 + $0xc4] sm:$0xff]
    %v778 = vld [vmem:[#allocation6 + $0xcc] sm:$0xff]
    %v779 = vld [vmem:[#allocation6 + $0xd4] sm:$0xff]
    %v780 = vld [vmem:[#allocation6 + $0xdc] sm:$0xf]
    %v781 = vld [vmem:[#allocation6 + $0xe0] sm:$0xff]
    %v782 = vld [vmem:[#allocation6 + $0xe8] sm:$0xff]
    %v783 = vld [vmem:[#allocation6 + $0xf0] sm:$0xff]
    %v784 = vld [vmem:[#allocation6 + $0xf8] sm:$0xf]
    %v785 = vld [vmem:[#allocation6 + $0xfc] sm:$0xff]
    %v786 = vld [vmem:[#allocation6 + $0x104] sm:$0xff]
    %v787 = vld [vmem:[#allocation6 + $0x10c] sm:$0xff]
    %v788 = vld [vmem:[#allocation6 + $0x114] sm:$0xf]
    %v789 = vld [vmem:[#allocation6 + $0x118] sm:$0xff]
    %v790 = vld [vmem:[#allocation6 + $0x120] sm:$0xff]
    %v791 = vld [vmem:[#allocation6 + $0x128] sm:$0xff]
    %v792 = vld [vmem:[#allocation6 + $0x130] sm:$0xf]
    %v793 = vld [vmem:[#allocation6 + $0x134] sm:$0xff]
    %v794 = vld [vmem:[#allocation6 + $0x13c] sm:$0xff]
    %v795 = vld [vmem:[#allocation6 + $0x144] sm:$0xff]
    %v796 = vld [vmem:[#allocation6 + $0x14c] sm:$0xf]
    %v797 = vld [vmem:[#allocation6 + $0x150] sm:$0xff]
    %v798 = vld [vmem:[#allocation6 + $0x158] sm:$0xff]
    %v799 = vld [vmem:[#allocation6 + $0x160] sm:$0xff]
    %v800 = vld [vmem:[#allocation6 + $0x168] sm:$0xf]
    %v801 = vld [vmem:[#allocation6 + $0x16c] sm:$0xff]
    %v802 = vld [vmem:[#allocation6 + $0x174] sm:$0xff]
    %v803 = vld [vmem:[#allocation6 + $0x17c] sm:$0xff]
    %v804 = vld [vmem:[#allocation6 + $0x184] sm:$0xf]
    %v805 = vld [vmem:[#allocation6 + $0x188] sm:$0xff]
    %v806 = vld [vmem:[#allocation6 + $0x190] sm:$0xff]
    %v807 = vld [vmem:[#allocation6 + $0x198] sm:$0xff]
    %v808 = vld [vmem:[#allocation6 + $0x1a0] sm:$0xf]
    %v809 = vld [vmem:[#allocation6 + $0x1a4] sm:$0xff]
    %v810 = vld [vmem:[#allocation6 + $0x1ac] sm:$0xff]
    %v811 = vld [vmem:[#allocation6 + $0x1b4] sm:$0xff]
    %v812 = vld [vmem:[#allocation6 + $0x1bc] sm:$0xf]
    %v813 = vld [vmem:[#allocation6 + $0x1c0] sm:$0xff]
    %v814 = vld [vmem:[#allocation6 + $0x1c8] sm:$0xff]
    %v815 = vld [vmem:[#allocation6 + $0x1d0] sm:$0xff]
    %v816 = vld [vmem:[#allocation6 + $0x1d8] sm:$0xf]
    %v817 = vld [vmem:[#allocation6 + $0x1dc] sm:$0xff]
    %v818 = vld [vmem:[#allocation6 + $0x1e4] sm:$0xff]
    %v819 = vld [vmem:[#allocation6 + $0x1ec] sm:$0xff]
    %v820 = vld [vmem:[#allocation6 + $0x1f4] sm:$0xf]
    %v821 = vld [vmem:[#allocation6 + $0x1f8] sm:$0xff]
    %v822 = vld [vmem:[#allocation6 + $0x200] sm:$0xff]
    %v823 = vld [vmem:[#allocation6 + $0x208] sm:$0xff]
    %v824 = vld [vmem:[#allocation6 + $0x210] sm:$0xf]
    %v825 = vld [vmem:[#allocation6 + $0x214] sm:$0xff]
    %v826 = vld [vmem:[#allocation6 + $0x21c] sm:$0xff]
    %v827 = vld [vmem:[#allocation6 + $0x224] sm:$0xff]
    %v828 = vld [vmem:[#allocation6 + $0x22c] sm:$0xf]
    %v829 = vld [vmem:[#allocation6 + $0x230] sm:$0xff]
    %v830 = vld [vmem:[#allocation6 + $0x238] sm:$0xff]
    %v831 = vld [vmem:[#allocation6 + $0x240] sm:$0xff]
    %v832 = vld [vmem:[#allocation6 + $0x248] sm:$0xf]
    %v833 = vld [vmem:[#allocation6 + $0x24c] sm:$0xff]
    %v834 = vld [vmem:[#allocation6 + $0x254] sm:$0xff]
    %v835 = vld [vmem:[#allocation6 + $0x25c] sm:$0xff]
    %v836 = vld [vmem:[#allocation6 + $0x264] sm:$0xf]
    %v837 = vld [vmem:[#allocation6 + $0x268] sm:$0xff]
    %v838 = vld [vmem:[#allocation6 + $0x270] sm:$0xff]
    %v839 = vld [vmem:[#allocation6 + $0x278] sm:$0xff]
    %v840 = vld [vmem:[#allocation6 + $0x280] sm:$0xf]
    %v841 = vld [vmem:[#allocation6 + $0x284] sm:$0xff]
    %v842 = vld [vmem:[#allocation6 + $0x28c] sm:$0xff]
    %v843 = vld [vmem:[#allocation6 + $0x294] sm:$0xff]
    %v844 = vld [vmem:[#allocation6 + $0x29c] sm:$0xf]
    %v845 = vld [vmem:[#allocation6 + $0x2a0] sm:$0xff]
    %v846 = vld [vmem:[#allocation6 + $0x2a8] sm:$0xff]
    %v847 = vld [vmem:[#allocation6 + $0x2b0] sm:$0xff]
    %v848 = vld [vmem:[#allocation6 + $0x2b8] sm:$0xf]
    %v849 = vld [vmem:[#allocation6 + $0x2bc] sm:$0xff]
    %v850 = vld [vmem:[#allocation6 + $0x2c4] sm:$0xff]
    %v851 = vld [vmem:[#allocation6 + $0x2cc] sm:$0xff]
    %v852 = vld [vmem:[#allocation6 + $0x2d4] sm:$0xf]
    %v853 = vld [vmem:[#allocation6 + $0x2d8] sm:$0xff]
    %v854 = vld [vmem:[#allocation6 + $0x2e0] sm:$0xff]
    %v855 = vld [vmem:[#allocation6 + $0x2e8] sm:$0xff]
    %v856 = vld [vmem:[#allocation6 + $0x2f0] sm:$0xf]
    %v857 = vld [vmem:[#allocation6 + $0x2f4] sm:$0xff]
    %v858 = vld [vmem:[#allocation6 + $0x2fc] sm:$0xff]
    %v859 = vld [vmem:[#allocation6 + $0x304] sm:$0xff]
    %v860 = vld [vmem:[#allocation6 + $0x30c] sm:$0xf]
    %v861 = vld [vmem:[#allocation6 + $0x310] sm:$0xff]
    %v862 = vld [vmem:[#allocation6 + $0x318] sm:$0xff]
    %v863 = vld [vmem:[#allocation6 + $0x320] sm:$0xff]
    %v864 = vld [vmem:[#allocation6 + $0x328] sm:$0xf]
    %v865 = vld [vmem:[#allocation6 + $0x32c] sm:$0xff]
    %v866 = vld [vmem:[#allocation6 + $0x334] sm:$0xff]
    %v867 = vld [vmem:[#allocation6 + $0x33c] sm:$0xff]
    %v868 = vld [vmem:[#allocation6 + $0x344] sm:$0xf]
    %v869 = vld [vmem:[#allocation6 + $0x348] sm:$0xff]
    %v870 = vld [vmem:[#allocation6 + $0x350] sm:$0xff]
    %v871 = vld [vmem:[#allocation6 + $0x358] sm:$0xff]
    %v872 = vld [vmem:[#allocation6 + $0x360] sm:$0xf]
    %v873 = vld [vmem:[#allocation6 + $0x364] sm:$0xff]
    %v874 = vld [vmem:[#allocation6 + $0x36c] sm:$0xff]
    %v875 = vld [vmem:[#allocation6 + $0x374] sm:$0xff]
    %v876 = vld [vmem:[#allocation6 + $0x37c] sm:$0xf]
    %v877 = vld [vmem:[#allocation6 + $0x380] sm:$0xff]
    %v878 = vld [vmem:[#allocation6 + $0x388] sm:$0xff]
    %v879 = vld [vmem:[#allocation6 + $0x390] sm:$0xff]
    %v880 = vld [vmem:[#allocation6 + $0x398] sm:$0xf]
    %v881 = vld [vmem:[#allocation6 + $0x39c] sm:$0xff]
    %v882 = vld [vmem:[#allocation6 + $0x3a4] sm:$0xff]
    %v883 = vld [vmem:[#allocation6 + $0x3ac] sm:$0xff]
    %v884 = vld [vmem:[#allocation6 + $0x3b4] sm:$0xf]
    %v885 = vld [vmem:[#allocation6 + $0x3b8] sm:$0xff]
    %v886 = vld [vmem:[#allocation6 + $0x3c0] sm:$0xff]
    %v887 = vld [vmem:[#allocation6 + $0x3c8] sm:$0xff]
    %v888 = vld [vmem:[#allocation6 + $0x3d0] sm:$0xf]
    %v889 = vld [vmem:[#allocation6 + $0x3d4] sm:$0xff]
    %v890 = vld [vmem:[#allocation6 + $0x3dc] sm:$0xff]
    %v891 = vld [vmem:[#allocation6 + $0x3e4] sm:$0xff]
    %v892 = vld [vmem:[#allocation6 + $0x3ec] sm:$0xf]
    %v893 = vld [vmem:[#allocation6 + $0x3f0] sm:$0xff]
    %v894 = vld [vmem:[#allocation6 + $0x3f8] sm:$0xff]
    %v895 = vld [vmem:[#allocation6 + $0x400] sm:$0xff]
    %v896 = vld [vmem:[#allocation6 + $0x408] sm:$0xf]
    %v897 = vld [vmem:[#allocation6 + $0x40c] sm:$0xff]
    %v898 = vld [vmem:[#allocation6 + $0x414] sm:$0xff]
    %v899 = vld [vmem:[#allocation6 + $0x41c] sm:$0xff]
    %v900 = vld [vmem:[#allocation6 + $0x424] sm:$0xf]
    %v901 = vld [vmem:[#allocation6 + $0x428] sm:$0xff]
    %v902 = vld [vmem:[#allocation6 + $0x430] sm:$0xff]
    %v903 = vld [vmem:[#allocation6 + $0x438] sm:$0xff]
    %v904 = vld [vmem:[#allocation6 + $0x440] sm:$0xf]
    %v905 = vld [vmem:[#allocation6 + $0x444] sm:$0xff]
    %v906 = vld [vmem:[#allocation6 + $0x44c] sm:$0xff]
    %v907 = vld [vmem:[#allocation6 + $0x454] sm:$0xff]
    %v908 = vld [vmem:[#allocation6 + $0x45c] sm:$0xf]
    %v909 = vld [vmem:[#allocation6 + $0x460] sm:$0xff]
    %v910 = vld [vmem:[#allocation6 + $0x468] sm:$0xff]
    %v911 = vld [vmem:[#allocation6 + $0x470] sm:$0xff]
    %v912 = vld [vmem:[#allocation6 + $0x478] sm:$0xf]
    %v913 = vld [vmem:[#allocation6 + $0x47c] sm:$0xff]
    %v914 = vld [vmem:[#allocation6 + $0x484] sm:$0xff]
    %v915 = vld [vmem:[#allocation6 + $0x48c] sm:$0xff]
    %v916 = vld [vmem:[#allocation6 + $0x494] sm:$0xf]
    %v917 = vld [vmem:[#allocation6 + $0x498] sm:$0xff]
    %v918 = vld [vmem:[#allocation6 + $0x4a0] sm:$0xff]
    %v919 = vld [vmem:[#allocation6 + $0x4a8] sm:$0xff]
    %v920 = vld [vmem:[#allocation6 + $0x4b0] sm:$0xf]
    %v921 = vld [vmem:[#allocation6 + $0x4b4] sm:$0xff]
    %v922 = vld [vmem:[#allocation6 + $0x4bc] sm:$0xff]
    %v923 = vld [vmem:[#allocation6 + $0x4c4] sm:$0xff]
    %v924 = vld [vmem:[#allocation6 + $0x4cc] sm:$0xf]
    %v925 = vld [vmem:[#allocation6 + $0x4d0] sm:$0xff]
    %v926 = vld [vmem:[#allocation6 + $0x4d8] sm:$0xff]
    %v927 = vld [vmem:[#allocation6 + $0x4e0] sm:$0xff]
    %v928 = vld [vmem:[#allocation6 + $0x4e8] sm:$0xf]
    %v929 = vld [vmem:[#allocation6 + $0x4ec] sm:$0xff]
    %v930 = vld [vmem:[#allocation6 + $0x4f4] sm:$0xff]
    %v931 = vld [vmem:[#allocation6 + $0x4fc] sm:$0xff]
    %v932 = vld [vmem:[#allocation6 + $0x504] sm:$0xf]
    %v933 = vld [vmem:[#allocation6 + $0x508] sm:$0xff]
    %v934 = vld [vmem:[#allocation6 + $0x510] sm:$0xff]
    %v935 = vld [vmem:[#allocation6 + $0x518] sm:$0xff]
    %v936 = vld [vmem:[#allocation6 + $0x520] sm:$0xf]
    %v937 = vld [vmem:[#allocation6 + $0x524] sm:$0xff]
    %v938 = vld [vmem:[#allocation6 + $0x52c] sm:$0xff]
    %v939 = vld [vmem:[#allocation6 + $0x534] sm:$0xff]
    %v940 = vld [vmem:[#allocation6 + $0x53c] sm:$0xf]
    %v941 = vld [vmem:[#allocation6 + $0x540] sm:$0xff]
    %v942 = vld [vmem:[#allocation6 + $0x548] sm:$0xff]
    %v943 = vld [vmem:[#allocation6 + $0x550] sm:$0xff]
    %v944 = vld [vmem:[#allocation6 + $0x558] sm:$0xf]
    %v945 = vld [vmem:[#allocation6 + $0x55c] sm:$0xff]
    %v946 = vld [vmem:[#allocation6 + $0x564] sm:$0xff]
    %v947 = vld [vmem:[#allocation6 + $0x56c] sm:$0xff]
    %v948 = vld [vmem:[#allocation6 + $0x574] sm:$0xf]
    %v949 = vld [vmem:[#allocation6 + $0x578] sm:$0xff]
    %v950 = vld [vmem:[#allocation6 + $0x580] sm:$0xff]
    %v951 = vld [vmem:[#allocation6 + $0x588] sm:$0xff]
    %v952 = vld [vmem:[#allocation6 + $0x590] sm:$0xf]
    %v953 = vld [vmem:[#allocation6 + $0x594] sm:$0xff]
    %v954 = vld [vmem:[#allocation6 + $0x59c] sm:$0xff]
    %v955 = vld [vmem:[#allocation6 + $0x5a4] sm:$0xff]
    %v956 = vld [vmem:[#allocation6 + $0x5ac] sm:$0xf]
    %v957 = vld [vmem:[#allocation6 + $0x5b0] sm:$0xff]
    %v958 = vld [vmem:[#allocation6 + $0x5b8] sm:$0xff]
    %v959 = vld [vmem:[#allocation6 + $0x5c0] sm:$0xff]
    %v960 = vld [vmem:[#allocation6 + $0x5c8] sm:$0xf]
    %v961 = vld [vmem:[#allocation6 + $0x5cc] sm:$0xff]
    %v962 = vld [vmem:[#allocation6 + $0x5d4] sm:$0xff]
    %v963 = vld [vmem:[#allocation6 + $0x5dc] sm:$0xff]
    %v964 = vld [vmem:[#allocation6 + $0x5e4] sm:$0xf]
    %v965 = vld [vmem:[#allocation6 + $0x5e8] sm:$0xff]
    %v966 = vld [vmem:[#allocation6 + $0x5f0] sm:$0xff]
    %v967 = vld [vmem:[#allocation6 + $0x5f8] sm:$0xff]
    %v968 = vld [vmem:[#allocation6 + $0x600] sm:$0xf]
    %v969 = vld [vmem:[#allocation6 + $0x604] sm:$0xff]
    %v970 = vld [vmem:[#allocation6 + $0x60c] sm:$0xff]
    %v971 = vld [vmem:[#allocation6 + $0x614] sm:$0xff]
    %v972 = vld [vmem:[#allocation6 + $0x61c] sm:$0xf]
    %v973 = vld [vmem:[#allocation6 + $0x620] sm:$0xff]
    %v974 = vld [vmem:[#allocation6 + $0x628] sm:$0xff]
    %v975 = vld [vmem:[#allocation6 + $0x630] sm:$0xff]
    %v976 = vld [vmem:[#allocation6 + $0x638] sm:$0xf]
    %v977 = vld [vmem:[#allocation6 + $0x63c] sm:$0xff]
    %v978 = vld [vmem:[#allocation6 + $0x644] sm:$0xff]
    %v979 = vld [vmem:[#allocation6 + $0x64c] sm:$0xff]
    %v980 = vld [vmem:[#allocation6 + $0x654] sm:$0xf]
    %v981 = vld [vmem:[#allocation6 + $0x658] sm:$0xff]
    %v982 = vld [vmem:[#allocation6 + $0x660] sm:$0xff]
    %v983 = vld [vmem:[#allocation6 + $0x668] sm:$0xff]
    %v984 = vld [vmem:[#allocation6 + $0x670] sm:$0xf]
    %v985 = vld [vmem:[#allocation6 + $0x674] sm:$0xff]
    %v986 = vld [vmem:[#allocation6 + $0x67c] sm:$0xff]
    %v987 = vld [vmem:[#allocation6 + $0x684] sm:$0xff]
    %v988 = vld [vmem:[#allocation6 + $0x68c] sm:$0xf]
    %v989 = vld [vmem:[#allocation6 + $0x690] sm:$0xff]
    %v990 = vld [vmem:[#allocation6 + $0x698] sm:$0xff]
    %v991 = vld [vmem:[#allocation6 + $0x6a0] sm:$0xff]
    %v992 = vld [vmem:[#allocation6 + $0x6a8] sm:$0xf]
    %v993 = vld [vmem:[#allocation6 + $0x6ac] sm:$0xff]
    %v994 = vld [vmem:[#allocation6 + $0x6b4] sm:$0xff]
    %v995 = vld [vmem:[#allocation6 + $0x6bc] sm:$0xff]
    %v996 = vld [vmem:[#allocation6 + $0x6c4] sm:$0xf]
    %v997 = vld [vmem:[#allocation6 + $0x6c8] sm:$0xff]
    %v998 = vld [vmem:[#allocation6 + $0x6d0] sm:$0xff]
    %v999 = vld [vmem:[#allocation6 + $0x6d8] sm:$0xff]
    %v1000 = vld [vmem:[#allocation6 + $0x6e0] sm:$0xf]
    %v1001 = vld [vmem:[#allocation6 + $0x6e4] sm:$0xff]
    %v1002 = vld [vmem:[#allocation6 + $0x6ec] sm:$0xff]
    %v1003 = vld [vmem:[#allocation6 + $0x6f4] sm:$0xff]
    %v1004 = vld [vmem:[#allocation6 + $0x6fc] sm:$0xf]
    %v1005 = vld [vmem:[%s6] sm:$0xff]
    %v1007 = vlaneseq
    %v1008 = vshrl.u32 %v1007, 7
    %v1009 = vsub.s32 0, %v1008
    %v1010 = vrot.slane %v1005, %v1009
    %v1011 = vlaneseq
    %v1012 = vshrl.u32 %v1011, 7
    %v1013 = vsub.s32 1, %v1012
    %v1014 = vrot.slane %v1005, %v1013
    %v1015 = vlaneseq
    %v1016 = vshrl.u32 %v1015, 7
    %v1017 = vsub.s32 2, %v1016
    %v1018 = vrot.slane %v1005, %v1017
    %v1019 = vlaneseq
    %v1020 = vshrl.u32 %v1019, 7
    %v1021 = vsub.s32 3, %v1020
    %v1022 = vrot.slane %v1005, %v1021
    %v1023 = vlaneseq
    %v1024 = vshrl.u32 %v1023, 7
    %v1025 = vsub.s32 4, %v1024
    %v1026 = vrot.slane %v1005, %v1025
    %v1027 = vlaneseq
    %v1028 = vshrl.u32 %v1027, 7
    %v1029 = vsub.s32 5, %v1028
    %v1030 = vrot.slane %v1005, %v1029
    %v1031 = vlaneseq
    %v1032 = vshrl.u32 %v1031, 7
    %v1033 = vsub.s32 6, %v1032
    %v1034 = vrot.slane %v1005, %v1033
    %v1298 = vunpack.c.l.b16 %v749
    %v1299 = vunpack.c.h.b16 %v749
    %v1300 = vunpack.c.l.b16 %v750
    %v1301 = vunpack.c.h.b16 %v750
    %v1302 = vunpack.c.l.b16 %v751
    %v1303 = vunpack.c.h.b16 %v751
    %v1304 = vunpack.c.l.b16 %v752
    %v1305 = vunpack.c.l.b16 %v753
    %v1306 = vunpack.c.h.b16 %v753
    %v1307 = vunpack.c.l.b16 %v754
    %v1308 = vunpack.c.h.b16 %v754
    %v1309 = vunpack.c.l.b16 %v755
    %v1310 = vunpack.c.h.b16 %v755
    %v1311 = vunpack.c.l.b16 %v756
    %v1312 = vunpack.c.l.b16 %v757
    %v1313 = vunpack.c.h.b16 %v757
    %v1314 = vunpack.c.l.b16 %v758
    %v1315 = vunpack.c.h.b16 %v758
    %v1316 = vunpack.c.l.b16 %v759
    %v1317 = vunpack.c.h.b16 %v759
    %v1318 = vunpack.c.l.b16 %v760
    %v1319 = vunpack.c.l.b16 %v761
    %v1320 = vunpack.c.h.b16 %v761
    %v1321 = vunpack.c.l.b16 %v762
    %v1322 = vunpack.c.h.b16 %v762
    %v1323 = vunpack.c.l.b16 %v763
    %v1324 = vunpack.c.h.b16 %v763
    %v1325 = vunpack.c.l.b16 %v764
    %v1326 = vunpack.c.l.b16 %v765
    %v1327 = vunpack.c.h.b16 %v765
    %v1328 = vunpack.c.l.b16 %v766
    %v1329 = vunpack.c.h.b16 %v766
    %v1330 = vunpack.c.l.b16 %v767
    %v1331 = vunpack.c.h.b16 %v767
    %v1332 = vunpack.c.l.b16 %v768
    %v1333 = vunpack.c.l.b16 %v769
    %v1334 = vunpack.c.h.b16 %v769
    %v1335 = vunpack.c.l.b16 %v770
    %v1336 = vunpack.c.h.b16 %v770
    %v1337 = vunpack.c.l.b16 %v771
    %v1338 = vunpack.c.h.b16 %v771
    %v1339 = vunpack.c.l.b16 %v772
    %v1340 = vunpack.c.l.b16 %v773
    %v1341 = vunpack.c.h.b16 %v773
    %v1342 = vunpack.c.l.b16 %v774
    %v1343 = vunpack.c.h.b16 %v774
    %v1344 = vunpack.c.l.b16 %v775
    %v1345 = vunpack.c.h.b16 %v775
    %v1346 = vunpack.c.l.b16 %v776
    %v1347 = vunpack.c.l.b16 %v777
    %v1348 = vunpack.c.h.b16 %v777
    %v1349 = vunpack.c.l.b16 %v778
    %v1350 = vunpack.c.h.b16 %v778
    %v1351 = vunpack.c.l.b16 %v779
    %v1352 = vunpack.c.h.b16 %v779
    %v1353 = vunpack.c.l.b16 %v780
    %v1354 = vunpack.c.l.b16 %v781
    %v1355 = vunpack.c.h.b16 %v781
    %v1356 = vunpack.c.l.b16 %v782
    %v1357 = vunpack.c.h.b16 %v782
    %v1358 = vunpack.c.l.b16 %v783
    %v1359 = vunpack.c.h.b16 %v783
    %v1360 = vunpack.c.l.b16 %v784
    %v1361 = vunpack.c.l.b16 %v785
    %v1362 = vunpack.c.h.b16 %v785
    %v1363 = vunpack.c.l.b16 %v786
    %v1364 = vunpack.c.h.b16 %v786
    %v1365 = vunpack.c.l.b16 %v787
    %v1366 = vunpack.c.h.b16 %v787
    %v1367 = vunpack.c.l.b16 %v788
    %v1368 = vunpack.c.l.b16 %v789
    %v1369 = vunpack.c.h.b16 %v789
    %v1370 = vunpack.c.l.b16 %v790
    %v1371 = vunpack.c.h.b16 %v790
    %v1372 = vunpack.c.l.b16 %v791
    %v1373 = vunpack.c.h.b16 %v791
    %v1374 = vunpack.c.l.b16 %v792
    %v1375 = vunpack.c.l.b16 %v793
    %v1376 = vunpack.c.h.b16 %v793
    %v1377 = vunpack.c.l.b16 %v794
    %v1378 = vunpack.c.h.b16 %v794
    %v1379 = vunpack.c.l.b16 %v795
    %v1380 = vunpack.c.h.b16 %v795
    %v1381 = vunpack.c.l.b16 %v796
    %v1382 = vunpack.c.l.b16 %v797
    %v1383 = vunpack.c.h.b16 %v797
    %v1384 = vunpack.c.l.b16 %v798
    %v1385 = vunpack.c.h.b16 %v798
    %v1386 = vunpack.c.l.b16 %v799
    %v1387 = vunpack.c.h.b16 %v799
    %v1388 = vunpack.c.l.b16 %v800
    %v1389 = vunpack.c.l.b16 %v801
    %v1390 = vunpack.c.h.b16 %v801
    %v1391 = vunpack.c.l.b16 %v802
    %v1392 = vunpack.c.h.b16 %v802
    %v1393 = vunpack.c.l.b16 %v803
    %v1394 = vunpack.c.h.b16 %v803
    %v1395 = vunpack.c.l.b16 %v804
    %v1396 = vunpack.c.l.b16 %v805
    %v1397 = vunpack.c.h.b16 %v805
    %v1398 = vunpack.c.l.b16 %v806
    %v1399 = vunpack.c.h.b16 %v806
    %v1400 = vunpack.c.l.b16 %v807
    %v1401 = vunpack.c.h.b16 %v807
    %v1402 = vunpack.c.l.b16 %v808
    %v1403 = vunpack.c.l.b16 %v809
    %v1404 = vunpack.c.h.b16 %v809
    %v1405 = vunpack.c.l.b16 %v810
    %v1406 = vunpack.c.h.b16 %v810
    %v1407 = vunpack.c.l.b16 %v811
    %v1408 = vunpack.c.h.b16 %v811
    %v1409 = vunpack.c.l.b16 %v812
    %v1410 = vunpack.c.l.b16 %v813
    %v1411 = vunpack.c.h.b16 %v813
    %v1412 = vunpack.c.l.b16 %v814
    %v1413 = vunpack.c.h.b16 %v814
    %v1414 = vunpack.c.l.b16 %v815
    %v1415 = vunpack.c.h.b16 %v815
    %v1416 = vunpack.c.l.b16 %v816
    %v1417 = vunpack.c.l.b16 %v817
    %v1418 = vunpack.c.h.b16 %v817
    %v1419 = vunpack.c.l.b16 %v818
    %v1420 = vunpack.c.h.b16 %v818
    %v1421 = vunpack.c.l.b16 %v819
    %v1422 = vunpack.c.h.b16 %v819
    %v1423 = vunpack.c.l.b16 %v820
    %v1424 = vunpack.c.l.b16 %v821
    %v1425 = vunpack.c.h.b16 %v821
    %v1426 = vunpack.c.l.b16 %v822
    %v1427 = vunpack.c.h.b16 %v822
    %v1428 = vunpack.c.l.b16 %v823
    %v1429 = vunpack.c.h.b16 %v823
    %v1430 = vunpack.c.l.b16 %v824
    %v1431 = vunpack.c.l.b16 %v825
    %v1432 = vunpack.c.h.b16 %v825
    %v1433 = vunpack.c.l.b16 %v826
    %v1434 = vunpack.c.h.b16 %v826
    %v1435 = vunpack.c.l.b16 %v827
    %v1436 = vunpack.c.h.b16 %v827
    %v1437 = vunpack.c.l.b16 %v828
    %v1438 = vunpack.c.l.b16 %v829
    %v1439 = vunpack.c.h.b16 %v829
    %v1440 = vunpack.c.l.b16 %v830
    %v1441 = vunpack.c.h.b16 %v830
    %v1442 = vunpack.c.l.b16 %v831
    %v1443 = vunpack.c.h.b16 %v831
    %v1444 = vunpack.c.l.b16 %v832
    %v1445 = vunpack.c.l.b16 %v833
    %v1446 = vunpack.c.h.b16 %v833
    %v1447 = vunpack.c.l.b16 %v834
    %v1448 = vunpack.c.h.b16 %v834
    %v1449 = vunpack.c.l.b16 %v835
    %v1450 = vunpack.c.h.b16 %v835
    %v1451 = vunpack.c.l.b16 %v836
    %v1452 = vunpack.c.l.b16 %v837
    %v1453 = vunpack.c.h.b16 %v837
    %v1454 = vunpack.c.l.b16 %v838
    %v1455 = vunpack.c.h.b16 %v838
    %v1456 = vunpack.c.l.b16 %v839
    %v1457 = vunpack.c.h.b16 %v839
    %v1458 = vunpack.c.l.b16 %v840
    %v1459 = vunpack.c.l.b16 %v841
    %v1460 = vunpack.c.h.b16 %v841
    %v1461 = vunpack.c.l.b16 %v842
    %v1462 = vunpack.c.h.b16 %v842
    %v1463 = vunpack.c.l.b16 %v843
    %v1464 = vunpack.c.h.b16 %v843
    %v1465 = vunpack.c.l.b16 %v844
    %v1466 = vunpack.c.l.b16 %v845
    %v1467 = vunpack.c.h.b16 %v845
    %v1468 = vunpack.c.l.b16 %v846
    %v1469 = vunpack.c.h.b16 %v846
    %v1470 = vunpack.c.l.b16 %v847
    %v1471 = vunpack.c.h.b16 %v847
    %v1472 = vunpack.c.l.b16 %v848
    %v1473 = vunpack.c.l.b16 %v849
    %v1474 = vunpack.c.h.b16 %v849
    %v1475 = vunpack.c.l.b16 %v850
    %v1476 = vunpack.c.h.b16 %v850
    %v1477 = vunpack.c.l.b16 %v851
    %v1478 = vunpack.c.h.b16 %v851
    %v1479 = vunpack.c.l.b16 %v852
    %v1480 = vunpack.c.l.b16 %v853
    %v1481 = vunpack.c.h.b16 %v853
    %v1482 = vunpack.c.l.b16 %v854
    %v1483 = vunpack.c.h.b16 %v854
    %v1484 = vunpack.c.l.b16 %v855
    %v1485 = vunpack.c.h.b16 %v855
    %v1486 = vunpack.c.l.b16 %v856
    %v1487 = vunpack.c.l.b16 %v857
    %v1488 = vunpack.c.h.b16 %v857
    %v1489 = vunpack.c.l.b16 %v858
    %v1490 = vunpack.c.h.b16 %v858
    %v1491 = vunpack.c.l.b16 %v859
    %v1492 = vunpack.c.h.b16 %v859
    %v1493 = vunpack.c.l.b16 %v860
    %v1494 = vunpack.c.l.b16 %v861
    %v1495 = vunpack.c.h.b16 %v861
    %v1496 = vunpack.c.l.b16 %v862
    %v1497 = vunpack.c.h.b16 %v862
    %v1498 = vunpack.c.l.b16 %v863
    %v1499 = vunpack.c.h.b16 %v863
    %v1500 = vunpack.c.l.b16 %v864
    %v1501 = vunpack.c.l.b16 %v865
    %v1502 = vunpack.c.h.b16 %v865
    %v1503 = vunpack.c.l.b16 %v866
    %v1504 = vunpack.c.h.b16 %v866
    %v1505 = vunpack.c.l.b16 %v867
    %v1506 = vunpack.c.h.b16 %v867
    %v1507 = vunpack.c.l.b16 %v868
    %v1508 = vunpack.c.l.b16 %v869
    %v1509 = vunpack.c.h.b16 %v869
    %v1510 = vunpack.c.l.b16 %v870
    %v1511 = vunpack.c.h.b16 %v870
    %v1512 = vunpack.c.l.b16 %v871
    %v1513 = vunpack.c.h.b16 %v871
    %v1514 = vunpack.c.l.b16 %v872
    %v1515 = vunpack.c.l.b16 %v873
    %v1516 = vunpack.c.h.b16 %v873
    %v1517 = vunpack.c.l.b16 %v874
    %v1518 = vunpack.c.h.b16 %v874
    %v1519 = vunpack.c.l.b16 %v875
    %v1520 = vunpack.c.h.b16 %v875
    %v1521 = vunpack.c.l.b16 %v876
    %v1522 = vunpack.c.l.b16 %v877
    %v1523 = vunpack.c.h.b16 %v877
    %v1524 = vunpack.c.l.b16 %v878
    %v1525 = vunpack.c.h.b16 %v878
    %v1526 = vunpack.c.l.b16 %v879
    %v1527 = vunpack.c.h.b16 %v879
    %v1528 = vunpack.c.l.b16 %v880
    %v1529 = vunpack.c.l.b16 %v881
    %v1530 = vunpack.c.h.b16 %v881
    %v1531 = vunpack.c.l.b16 %v882
    %v1532 = vunpack.c.h.b16 %v882
    %v1533 = vunpack.c.l.b16 %v883
    %v1534 = vunpack.c.h.b16 %v883
    %v1535 = vunpack.c.l.b16 %v884
    %v1536 = vunpack.c.l.b16 %v885
    %v1537 = vunpack.c.h.b16 %v885
    %v1538 = vunpack.c.l.b16 %v886
    %v1539 = vunpack.c.h.b16 %v886
    %v1540 = vunpack.c.l.b16 %v887
    %v1541 = vunpack.c.h.b16 %v887
    %v1542 = vunpack.c.l.b16 %v888
    %v1543 = vunpack.c.l.b16 %v889
    %v1544 = vunpack.c.h.b16 %v889
    %v1545 = vunpack.c.l.b16 %v890
    %v1546 = vunpack.c.h.b16 %v890
    %v1547 = vunpack.c.l.b16 %v891
    %v1548 = vunpack.c.h.b16 %v891
    %v1549 = vunpack.c.l.b16 %v892
    %v1550 = vunpack.c.l.b16 %v893
    %v1551 = vunpack.c.h.b16 %v893
    %v1552 = vunpack.c.l.b16 %v894
    %v1553 = vunpack.c.h.b16 %v894
    %v1554 = vunpack.c.l.b16 %v895
    %v1555 = vunpack.c.h.b16 %v895
    %v1556 = vunpack.c.l.b16 %v896
    %v1557 = vunpack.c.l.b16 %v897
    %v1558 = vunpack.c.h.b16 %v897
    %v1559 = vunpack.c.l.b16 %v898
    %v1560 = vunpack.c.h.b16 %v898
    %v1561 = vunpack.c.l.b16 %v899
    %v1562 = vunpack.c.h.b16 %v899
    %v1563 = vunpack.c.l.b16 %v900
    %v1564 = vunpack.c.l.b16 %v901
    %v1565 = vunpack.c.h.b16 %v901
    %v1566 = vunpack.c.l.b16 %v902
    %v1567 = vunpack.c.h.b16 %v902
    %v1568 = vunpack.c.l.b16 %v903
    %v1569 = vunpack.c.h.b16 %v903
    %v1570 = vunpack.c.l.b16 %v904
    %v1571 = vunpack.c.l.b16 %v905
    %v1572 = vunpack.c.h.b16 %v905
    %v1573 = vunpack.c.l.b16 %v906
    %v1574 = vunpack.c.h.b16 %v906
    %v1575 = vunpack.c.l.b16 %v907
    %v1576 = vunpack.c.h.b16 %v907
    %v1577 = vunpack.c.l.b16 %v908
    %v1578 = vunpack.c.l.b16 %v909
    %v1579 = vunpack.c.h.b16 %v909
    %v1580 = vunpack.c.l.b16 %v910
    %v1581 = vunpack.c.h.b16 %v910
    %v1582 = vunpack.c.l.b16 %v911
    %v1583 = vunpack.c.h.b16 %v911
    %v1584 = vunpack.c.l.b16 %v912
    %v1585 = vunpack.c.l.b16 %v913
    %v1586 = vunpack.c.h.b16 %v913
    %v1587 = vunpack.c.l.b16 %v914
    %v1588 = vunpack.c.h.b16 %v914
    %v1589 = vunpack.c.l.b16 %v915
    %v1590 = vunpack.c.h.b16 %v915
    %v1591 = vunpack.c.l.b16 %v916
    %v1592 = vunpack.c.l.b16 %v917
    %v1593 = vunpack.c.h.b16 %v917
    %v1594 = vunpack.c.l.b16 %v918
    %v1595 = vunpack.c.h.b16 %v918
    %v1596 = vunpack.c.l.b16 %v919
    %v1597 = vunpack.c.h.b16 %v919
    %v1598 = vunpack.c.l.b16 %v920
    %v1599 = vunpack.c.l.b16 %v921
    %v1600 = vunpack.c.h.b16 %v921
    %v1601 = vunpack.c.l.b16 %v922
    %v1602 = vunpack.c.h.b16 %v922
    %v1603 = vunpack.c.l.b16 %v923
    %v1604 = vunpack.c.h.b16 %v923
    %v1605 = vunpack.c.l.b16 %v924
    %v1606 = vunpack.c.l.b16 %v925
    %v1607 = vunpack.c.h.b16 %v925
    %v1608 = vunpack.c.l.b16 %v926
    %v1609 = vunpack.c.h.b16 %v926
    %v1610 = vunpack.c.l.b16 %v927
    %v1611 = vunpack.c.h.b16 %v927
    %v1612 = vunpack.c.l.b16 %v928
    %v1613 = vunpack.c.l.b16 %v929
    %v1614 = vunpack.c.h.b16 %v929
    %v1615 = vunpack.c.l.b16 %v930
    %v1616 = vunpack.c.h.b16 %v930
    %v1617 = vunpack.c.l.b16 %v931
    %v1618 = vunpack.c.h.b16 %v931
    %v1619 = vunpack.c.l.b16 %v932
    %v1620 = vunpack.c.l.b16 %v933
    %v1621 = vunpack.c.h.b16 %v933
    %v1622 = vunpack.c.l.b16 %v934
    %v1623 = vunpack.c.h.b16 %v934
    %v1624 = vunpack.c.l.b16 %v935
    %v1625 = vunpack.c.h.b16 %v935
    %v1626 = vunpack.c.l.b16 %v936
    %v1627 = vunpack.c.l.b16 %v937
    %v1628 = vunpack.c.h.b16 %v937
    %v1629 = vunpack.c.l.b16 %v938
    %v1630 = vunpack.c.h.b16 %v938
    %v1631 = vunpack.c.l.b16 %v939
    %v1632 = vunpack.c.h.b16 %v939
    %v1633 = vunpack.c.l.b16 %v940
    %v1634 = vunpack.c.l.b16 %v941
    %v1635 = vunpack.c.h.b16 %v941
    %v1636 = vunpack.c.l.b16 %v942
    %v1637 = vunpack.c.h.b16 %v942
    %v1638 = vunpack.c.l.b16 %v943
    %v1639 = vunpack.c.h.b16 %v943
    %v1640 = vunpack.c.l.b16 %v944
    %v1641 = vunpack.c.l.b16 %v945
    %v1642 = vunpack.c.h.b16 %v945
    %v1643 = vunpack.c.l.b16 %v946
    %v1644 = vunpack.c.h.b16 %v946
    %v1645 = vunpack.c.l.b16 %v947
    %v1646 = vunpack.c.h.b16 %v947
    %v1647 = vunpack.c.l.b16 %v948
    %v1648 = vunpack.c.l.b16 %v949
    %v1649 = vunpack.c.h.b16 %v949
    %v1650 = vunpack.c.l.b16 %v950
    %v1651 = vunpack.c.h.b16 %v950
    %v1652 = vunpack.c.l.b16 %v951
    %v1653 = vunpack.c.h.b16 %v951
    %v1654 = vunpack.c.l.b16 %v952
    %v1655 = vunpack.c.l.b16 %v953
    %v1656 = vunpack.c.h.b16 %v953
    %v1657 = vunpack.c.l.b16 %v954
    %v1658 = vunpack.c.h.b16 %v954
    %v1659 = vunpack.c.l.b16 %v955
    %v1660 = vunpack.c.h.b16 %v955
    %v1661 = vunpack.c.l.b16 %v956
    %v1662 = vunpack.c.l.b16 %v957
    %v1663 = vunpack.c.h.b16 %v957
    %v1664 = vunpack.c.l.b16 %v958
    %v1665 = vunpack.c.h.b16 %v958
    %v1666 = vunpack.c.l.b16 %v959
    %v1667 = vunpack.c.h.b16 %v959
    %v1668 = vunpack.c.l.b16 %v960
    %v1669 = vunpack.c.l.b16 %v961
    %v1670 = vunpack.c.h.b16 %v961
    %v1671 = vunpack.c.l.b16 %v962
    %v1672 = vunpack.c.h.b16 %v962
    %v1673 = vunpack.c.l.b16 %v963
    %v1674 = vunpack.c.h.b16 %v963
    %v1675 = vunpack.c.l.b16 %v964
    %v1676 = vunpack.c.l.b16 %v965
    %v1677 = vunpack.c.h.b16 %v965
    %v1678 = vunpack.c.l.b16 %v966
    %v1679 = vunpack.c.h.b16 %v966
    %v1680 = vunpack.c.l.b16 %v967
    %v1681 = vunpack.c.h.b16 %v967
    %v1682 = vunpack.c.l.b16 %v968
    %v1683 = vunpack.c.l.b16 %v969
    %v1684 = vunpack.c.h.b16 %v969
    %v1685 = vunpack.c.l.b16 %v970
    %v1686 = vunpack.c.h.b16 %v970
    %v1687 = vunpack.c.l.b16 %v971
    %v1688 = vunpack.c.h.b16 %v971
    %v1689 = vunpack.c.l.b16 %v972
    %v1690 = vunpack.c.l.b16 %v973
    %v1691 = vunpack.c.h.b16 %v973
    %v1692 = vunpack.c.l.b16 %v974
    %v1693 = vunpack.c.h.b16 %v974
    %v1694 = vunpack.c.l.b16 %v975
    %v1695 = vunpack.c.h.b16 %v975
    %v1696 = vunpack.c.l.b16 %v976
    %v1697 = vunpack.c.l.b16 %v977
    %v1698 = vunpack.c.h.b16 %v977
    %v1699 = vunpack.c.l.b16 %v978
    %v1700 = vunpack.c.h.b16 %v978
    %v1701 = vunpack.c.l.b16 %v979
    %v1702 = vunpack.c.h.b16 %v979
    %v1703 = vunpack.c.l.b16 %v980
    %v1704 = vunpack.c.l.b16 %v981
    %v1705 = vunpack.c.h.b16 %v981
    %v1706 = vunpack.c.l.b16 %v982
    %v1707 = vunpack.c.h.b16 %v982
    %v1708 = vunpack.c.l.b16 %v983
    %v1709 = vunpack.c.h.b16 %v983
    %v1710 = vunpack.c.l.b16 %v984
    %v1711 = vunpack.c.l.b16 %v985
    %v1712 = vunpack.c.h.b16 %v985
    %v1713 = vunpack.c.l.b16 %v986
    %v1714 = vunpack.c.h.b16 %v986
    %v1715 = vunpack.c.l.b16 %v987
    %v1716 = vunpack.c.h.b16 %v987
    %v1717 = vunpack.c.l.b16 %v988
    %v1718 = vunpack.c.l.b16 %v989
    %v1719 = vunpack.c.h.b16 %v989
    %v1720 = vunpack.c.l.b16 %v990
    %v1721 = vunpack.c.h.b16 %v990
    %v1722 = vunpack.c.l.b16 %v991
    %v1723 = vunpack.c.h.b16 %v991
    %v1724 = vunpack.c.l.b16 %v992
    %v1725 = vunpack.c.l.b16 %v993
    %v1726 = vunpack.c.h.b16 %v993
    %v1727 = vunpack.c.l.b16 %v994
    %v1728 = vunpack.c.h.b16 %v994
    %v1729 = vunpack.c.l.b16 %v995
    %v1730 = vunpack.c.h.b16 %v995
    %v1731 = vunpack.c.l.b16 %v996
    %v1732 = vunpack.c.l.b16 %v997
    %v1733 = vunpack.c.h.b16 %v997
    %v1734 = vunpack.c.l.b16 %v998
    %v1735 = vunpack.c.h.b16 %v998
    %v1736 = vunpack.c.l.b16 %v999
    %v1737 = vunpack.c.h.b16 %v999
    %v1738 = vunpack.c.l.b16 %v1000
    %v1739 = vunpack.c.l.b16 %v1001
    %v1740 = vunpack.c.h.b16 %v1001
    %v1741 = vunpack.c.l.b16 %v1002
    %v1742 = vunpack.c.h.b16 %v1002
    %v1743 = vunpack.c.l.b16 %v1003
    %v1744 = vunpack.c.h.b16 %v1003
    %v1745 = vunpack.c.l.b16 %v1004
    %v1746 = vpack.c.b16 %v1305, %v1298
    %v1747 = vpack.c.b16 %v1306, %v1299
    %v1748 = vpack.c.b16 %v1307, %v1300
    %v1749 = vpack.c.b16 %v1308, %v1301
    %v1750 = vpack.c.b16 %v1309, %v1302
    %v1751 = vpack.c.b16 %v1310, %v1303
    %v1752 = vpack.c.b16 %v1311, %v1304
    %v1753 = vpack.c.b16 %v1319, %v1312
    %v1754 = vpack.c.b16 %v1320, %v1313
    %v1755 = vpack.c.b16 %v1321, %v1314
    %v1756 = vpack.c.b16 %v1322, %v1315
    %v1757 = vpack.c.b16 %v1323, %v1316
    %v1758 = vpack.c.b16 %v1324, %v1317
    %v1759 = vpack.c.b16 %v1325, %v1318
    %v1760 = vpack.c.b16 %v1333, %v1326
    %v1761 = vpack.c.b16 %v1334, %v1327
    %v1762 = vpack.c.b16 %v1335, %v1328
    %v1763 = vpack.c.b16 %v1336, %v1329
    %v1764 = vpack.c.b16 %v1337, %v1330
    %v1765 = vpack.c.b16 %v1338, %v1331
    %v1766 = vpack.c.b16 %v1339, %v1332
    %v1767 = vpack.c.b16 %v1347, %v1340
    %v1768 = vpack.c.b16 %v1348, %v1341
    %v1769 = vpack.c.b16 %v1349, %v1342
    %v1770 = vpack.c.b16 %v1350, %v1343
    %v1771 = vpack.c.b16 %v1351, %v1344
    %v1772 = vpack.c.b16 %v1352, %v1345
    %v1773 = vpack.c.b16 %v1353, %v1346
    %v1774 = vpack.c.b16 %v1361, %v1354
    %v1775 = vpack.c.b16 %v1362, %v1355
    %v1776 = vpack.c.b16 %v1363, %v1356
    %v1777 = vpack.c.b16 %v1364, %v1357
    %v1778 = vpack.c.b16 %v1365, %v1358
    %v1779 = vpack.c.b16 %v1366, %v1359
    %v1780 = vpack.c.b16 %v1367, %v1360
    %v1781 = vpack.c.b16 %v1375, %v1368
    %v1782 = vpack.c.b16 %v1376, %v1369
    %v1783 = vpack.c.b16 %v1377, %v1370
    %v1784 = vpack.c.b16 %v1378, %v1371
    %v1785 = vpack.c.b16 %v1379, %v1372
    %v1786 = vpack.c.b16 %v1380, %v1373
    %v1787 = vpack.c.b16 %v1381, %v1374
    %v1788 = vpack.c.b16 %v1389, %v1382
    %v1789 = vpack.c.b16 %v1390, %v1383
    %v1790 = vpack.c.b16 %v1391, %v1384
    %v1791 = vpack.c.b16 %v1392, %v1385
    %v1792 = vpack.c.b16 %v1393, %v1386
    %v1793 = vpack.c.b16 %v1394, %v1387
    %v1794 = vpack.c.b16 %v1395, %v1388
    %v1795 = vpack.c.b16 %v1403, %v1396
    %v1796 = vpack.c.b16 %v1404, %v1397
    %v1797 = vpack.c.b16 %v1405, %v1398
    %v1798 = vpack.c.b16 %v1406, %v1399
    %v1799 = vpack.c.b16 %v1407, %v1400
    %v1800 = vpack.c.b16 %v1408, %v1401
    %v1801 = vpack.c.b16 %v1409, %v1402
    %v1802 = vpack.c.b16 %v1417, %v1410
    %v1803 = vpack.c.b16 %v1418, %v1411
    %v1804 = vpack.c.b16 %v1419, %v1412
    %v1805 = vpack.c.b16 %v1420, %v1413
    %v1806 = vpack.c.b16 %v1421, %v1414
    %v1807 = vpack.c.b16 %v1422, %v1415
    %v1808 = vpack.c.b16 %v1423, %v1416
    %v1809 = vpack.c.b16 %v1431, %v1424
    %v1810 = vpack.c.b16 %v1432, %v1425
    %v1811 = vpack.c.b16 %v1433, %v1426
    %v1812 = vpack.c.b16 %v1434, %v1427
    %v1813 = vpack.c.b16 %v1435, %v1428
    %v1814 = vpack.c.b16 %v1436, %v1429
    %v1815 = vpack.c.b16 %v1437, %v1430
    %v1816 = vpack.c.b16 %v1445, %v1438
    %v1817 = vpack.c.b16 %v1446, %v1439
    %v1818 = vpack.c.b16 %v1447, %v1440
    %v1819 = vpack.c.b16 %v1448, %v1441
    %v1820 = vpack.c.b16 %v1449, %v1442
    %v1821 = vpack.c.b16 %v1450, %v1443
    %v1822 = vpack.c.b16 %v1451, %v1444
    %v1823 = vpack.c.b16 %v1459, %v1452
    %v1824 = vpack.c.b16 %v1460, %v1453
    %v1825 = vpack.c.b16 %v1461, %v1454
    %v1826 = vpack.c.b16 %v1462, %v1455
    %v1827 = vpack.c.b16 %v1463, %v1456
    %v1828 = vpack.c.b16 %v1464, %v1457
    %v1829 = vpack.c.b16 %v1465, %v1458
    %v1830 = vpack.c.b16 %v1473, %v1466
    %v1831 = vpack.c.b16 %v1474, %v1467
    %v1832 = vpack.c.b16 %v1475, %v1468
    %v1833 = vpack.c.b16 %v1476, %v1469
    %v1834 = vpack.c.b16 %v1477, %v1470
    %v1835 = vpack.c.b16 %v1478, %v1471
    %v1836 = vpack.c.b16 %v1479, %v1472
    %v1837 = vpack.c.b16 %v1487, %v1480
    %v1838 = vpack.c.b16 %v1488, %v1481
    %v1839 = vpack.c.b16 %v1489, %v1482
    %v1840 = vpack.c.b16 %v1490, %v1483
    %v1841 = vpack.c.b16 %v1491, %v1484
    %v1842 = vpack.c.b16 %v1492, %v1485
    %v1843 = vpack.c.b16 %v1493, %v1486
    %v1844 = vpack.c.b16 %v1501, %v1494
    %v1845 = vpack.c.b16 %v1502, %v1495
    %v1846 = vpack.c.b16 %v1503, %v1496
    %v1847 = vpack.c.b16 %v1504, %v1497
    %v1848 = vpack.c.b16 %v1505, %v1498
    %v1849 = vpack.c.b16 %v1506, %v1499
    %v1850 = vpack.c.b16 %v1507, %v1500
    %v1851 = vpack.c.b16 %v1515, %v1508
    %v1852 = vpack.c.b16 %v1516, %v1509
    %v1853 = vpack.c.b16 %v1517, %v1510
    %v1854 = vpack.c.b16 %v1518, %v1511
    %v1855 = vpack.c.b16 %v1519, %v1512
    %v1856 = vpack.c.b16 %v1520, %v1513
    %v1857 = vpack.c.b16 %v1521, %v1514
    %v1858 = vpack.c.b16 %v1529, %v1522
    %v1859 = vpack.c.b16 %v1530, %v1523
    %v1860 = vpack.c.b16 %v1531, %v1524
    %v1861 = vpack.c.b16 %v1532, %v1525
    %v1862 = vpack.c.b16 %v1533, %v1526
    %v1863 = vpack.c.b16 %v1534, %v1527
    %v1864 = vpack.c.b16 %v1535, %v1528
    %v1865 = vpack.c.b16 %v1543, %v1536
    %v1866 = vpack.c.b16 %v1544, %v1537
    %v1867 = vpack.c.b16 %v1545, %v1538
    %v1868 = vpack.c.b16 %v1546, %v1539
    %v1869 = vpack.c.b16 %v1547, %v1540
    %v1870 = vpack.c.b16 %v1548, %v1541
    %v1871 = vpack.c.b16 %v1549, %v1542
    %v1872 = vpack.c.b16 %v1557, %v1550
    %v1873 = vpack.c.b16 %v1558, %v1551
    %v1874 = vpack.c.b16 %v1559, %v1552
    %v1875 = vpack.c.b16 %v1560, %v1553
    %v1876 = vpack.c.b16 %v1561, %v1554
    %v1877 = vpack.c.b16 %v1562, %v1555
    %v1878 = vpack.c.b16 %v1563, %v1556
    %v1879 = vpack.c.b16 %v1571, %v1564
    %v1880 = vpack.c.b16 %v1572, %v1565
    %v1881 = vpack.c.b16 %v1573, %v1566
    %v1882 = vpack.c.b16 %v1574, %v1567
    %v1883 = vpack.c.b16 %v1575, %v1568
    %v1884 = vpack.c.b16 %v1576, %v1569
    %v1885 = vpack.c.b16 %v1577, %v1570
    %v1886 = vpack.c.b16 %v1585, %v1578
    %v1887 = vpack.c.b16 %v1586, %v1579
    %v1888 = vpack.c.b16 %v1587, %v1580
    %v1889 = vpack.c.b16 %v1588, %v1581
    %v1890 = vpack.c.b16 %v1589, %v1582
    %v1891 = vpack.c.b16 %v1590, %v1583
    %v1892 = vpack.c.b16 %v1591, %v1584
    %v1893 = vpack.c.b16 %v1599, %v1592
    %v1894 = vpack.c.b16 %v1600, %v1593
    %v1895 = vpack.c.b16 %v1601, %v1594
    %v1896 = vpack.c.b16 %v1602, %v1595
    %v1897 = vpack.c.b16 %v1603, %v1596
    %v1898 = vpack.c.b16 %v1604, %v1597
    %v1899 = vpack.c.b16 %v1605, %v1598
    %v1900 = vpack.c.b16 %v1613, %v1606
    %v1901 = vpack.c.b16 %v1614, %v1607
    %v1902 = vpack.c.b16 %v1615, %v1608
    %v1903 = vpack.c.b16 %v1616, %v1609
    %v1904 = vpack.c.b16 %v1617, %v1610
    %v1905 = vpack.c.b16 %v1618, %v1611
    %v1906 = vpack.c.b16 %v1619, %v1612
    %v1907 = vpack.c.b16 %v1627, %v1620
    %v1908 = vpack.c.b16 %v1628, %v1621
    %v1909 = vpack.c.b16 %v1629, %v1622
    %v1910 = vpack.c.b16 %v1630, %v1623
    %v1911 = vpack.c.b16 %v1631, %v1624
    %v1912 = vpack.c.b16 %v1632, %v1625
    %v1913 = vpack.c.b16 %v1633, %v1626
    %v1914 = vpack.c.b16 %v1641, %v1634
    %v1915 = vpack.c.b16 %v1642, %v1635
    %v1916 = vpack.c.b16 %v1643, %v1636
    %v1917 = vpack.c.b16 %v1644, %v1637
    %v1918 = vpack.c.b16 %v1645, %v1638
    %v1919 = vpack.c.b16 %v1646, %v1639
    %v1920 = vpack.c.b16 %v1647, %v1640
    %v1921 = vpack.c.b16 %v1655, %v1648
    %v1922 = vpack.c.b16 %v1656, %v1649
    %v1923 = vpack.c.b16 %v1657, %v1650
    %v1924 = vpack.c.b16 %v1658, %v1651
    %v1925 = vpack.c.b16 %v1659, %v1652
    %v1926 = vpack.c.b16 %v1660, %v1653
    %v1927 = vpack.c.b16 %v1661, %v1654
    %v1928 = vpack.c.b16 %v1669, %v1662
    %v1929 = vpack.c.b16 %v1670, %v1663
    %v1930 = vpack.c.b16 %v1671, %v1664
    %v1931 = vpack.c.b16 %v1672, %v1665
    %v1932 = vpack.c.b16 %v1673, %v1666
    %v1933 = vpack.c.b16 %v1674, %v1667
    %v1934 = vpack.c.b16 %v1675, %v1668
    %v1935 = vpack.c.b16 %v1683, %v1676
    %v1936 = vpack.c.b16 %v1684, %v1677
    %v1937 = vpack.c.b16 %v1685, %v1678
    %v1938 = vpack.c.b16 %v1686, %v1679
    %v1939 = vpack.c.b16 %v1687, %v1680
    %v1940 = vpack.c.b16 %v1688, %v1681
    %v1941 = vpack.c.b16 %v1689, %v1682
    %v1942 = vpack.c.b16 %v1697, %v1690
    %v1943 = vpack.c.b16 %v1698, %v1691
    %v1944 = vpack.c.b16 %v1699, %v1692
    %v1945 = vpack.c.b16 %v1700, %v1693
    %v1946 = vpack.c.b16 %v1701, %v1694
    %v1947 = vpack.c.b16 %v1702, %v1695
    %v1948 = vpack.c.b16 %v1703, %v1696
    %v1949 = vpack.c.b16 %v1711, %v1704
    %v1950 = vpack.c.b16 %v1712, %v1705
    %v1951 = vpack.c.b16 %v1713, %v1706
    %v1952 = vpack.c.b16 %v1714, %v1707
    %v1953 = vpack.c.b16 %v1715, %v1708
    %v1954 = vpack.c.b16 %v1716, %v1709
    %v1955 = vpack.c.b16 %v1717, %v1710
    %v1956 = vpack.c.b16 %v1725, %v1718
    %v1957 = vpack.c.b16 %v1726, %v1719
    %v1958 = vpack.c.b16 %v1727, %v1720
    %v1959 = vpack.c.b16 %v1728, %v1721
    %v1960 = vpack.c.b16 %v1729, %v1722
    %v1961 = vpack.c.b16 %v1730, %v1723
    %v1962 = vpack.c.b16 %v1731, %v1724
    %v1963 = vpack.c.b16 %v1739, %v1732
    %v1964 = vpack.c.b16 %v1740, %v1733
    %v1965 = vpack.c.b16 %v1741, %v1734
    %v1966 = vpack.c.b16 %v1742, %v1735
    %v1967 = vpack.c.b16 %v1743, %v1736
    %v1968 = vpack.c.b16 %v1744, %v1737
    %v1969 = vpack.c.b16 %v1745, %v1738
    %2194 = vmatprep.subr.bf16.mxu0 %v1747
    %2195 = vmatpush1.bf16.msra.mxu0 %v1746
    %2196 = vmatprep.subr.bf16.mxu0 %v1754
    %2197 = vmatpush1.bf16.msra.mxu0 %v1753
    %2198 = vmatprep.subr.bf16.mxu0 %v1761
    %2199 = vmatpush1.bf16.msra.mxu0 %v1760
    %2200 = vmatprep.subr.bf16.mxu0 %v1768
    %2201 = vmatpush1.bf16.msra.mxu0 %v1767
    %2202 = vmatprep.subr.bf16.mxu0 %v1775
    %2203 = vmatpush1.bf16.msra.mxu0 %v1774
    %2204 = vmatprep.subr.bf16.mxu0 %v1782
    %2205 = vmatpush1.bf16.msra.mxu0 %v1781
    %2206 = vmatprep.subr.bf16.mxu0 %v1789
    %2207 = vmatpush1.bf16.msra.mxu0 %v1788
    %2208 = vmatprep.subr.bf16.mxu0 %v1796
    %2209 = vmatpush1.bf16.msra.mxu0 %v1795
    %2210 = vmatprep.subr.bf16.mxu0 %v1803
    %2211 = vmatpush1.bf16.msra.mxu0 %v1802
    %2212 = vmatprep.subr.bf16.mxu0 %v1810
    %2213 = vmatpush1.bf16.msra.mxu0 %v1809
    %2214 = vmatprep.subr.bf16.mxu0 %v1817
    %2215 = vmatpush1.bf16.msra.mxu0 %v1816
    %2216 = vmatprep.subr.bf16.mxu0 %v1824
    %2217 = vmatpush1.bf16.msra.mxu0 %v1823
    %2218 = vmatprep.subr.bf16.mxu0 %v1831
    %2219 = vmatpush1.bf16.msra.mxu0 %v1830
    %2220 = vmatprep.subr.bf16.mxu0 %v1838
    %2221 = vmatpush1.bf16.msra.mxu0 %v1837
    %2222 = vmatprep.subr.bf16.mxu0 %v1845
    %2223 = vmatpush1.bf16.msra.mxu0 %v1844
    %2224 = vmatprep.subr.bf16.mxu0 %v1852
    %2225 = vmatpush1.bf16.msra.mxu0 %v1851
    %2226 = vmatprep.mubr.bf16.mxu0 %v746
    %2227 = vmatmul.mubr.bf16.gmra.mrb[0].mxu0 %v745
    %v2228 = vpop.f32.mrb[0].mxu0
    %v2229 = vadd.f32 %v1010, %v2228
    %v2230 = vpop.f32.mrb[0].mxu0
    %v2231 = vadd.f32 %v1014, %v2230
    %v2232 = vpop.f32.mrb[0].mxu0
    %v2233 = vadd.f32 %v1010, %v2232
    %v2234 = vpop.f32.mrb[0].mxu0
    %v2235 = vadd.f32 %v1014, %v2234
    %2236 = vdwg.mxu0
    %2237 = vmatprep.subr.bf16.mxu0 %v1859
    %2238 = vmatpush1.bf16.msra.mxu0 %v1858
    %2239 = vmatprep.subr.bf16.mxu0 %v1866
    %2240 = vmatpush1.bf16.msra.mxu0 %v1865
    %2241 = vmatprep.subr.bf16.mxu0 %v1873
    %2242 = vmatpush1.bf16.msra.mxu0 %v1872
    %2243 = vmatprep.subr.bf16.mxu0 %v1880
    %2244 = vmatpush1.bf16.msra.mxu0 %v1879
    %2245 = vmatprep.subr.bf16.mxu0 %v1887
    %2246 = vmatpush1.bf16.msra.mxu0 %v1886
    %2247 = vmatprep.subr.bf16.mxu0 %v1894
    %2248 = vmatpush1.bf16.msra.mxu0 %v1893
    %2249 = vmatprep.subr.bf16.mxu0 %v1901
    %2250 = vmatpush1.bf16.msra.mxu0 %v1900
    %2251 = vmatprep.subr.bf16.mxu0 %v1908
    %2252 = vmatpush1.bf16.msra.mxu0 %v1907
    %2253 = vmatprep.subr.bf16.mxu0 %v1915
    %2254 = vmatpush1.bf16.msra.mxu0 %v1914
    %2255 = vmatprep.subr.bf16.mxu0 %v1922
    %2256 = vmatpush1.bf16.msra.mxu0 %v1921
    %2257 = vmatprep.subr.bf16.mxu0 %v1929
    %2258 = vmatpush1.bf16.msra.mxu0 %v1928
    %2259 = vmatprep.subr.bf16.mxu0 %v1936
    %2260 = vmatpush1.bf16.msra.mxu0 %v1935
    %2261 = vmatprep.subr.bf16.mxu0 %v1943
    %2262 = vmatpush1.bf16.msra.mxu0 %v1942
    %2263 = vmatprep.subr.bf16.mxu0 %v1950
    %2264 = vmatpush1.bf16.msra.mxu0 %v1949
    %2265 = vmatprep.subr.bf16.mxu0 %v1957
    %2266 = vmatpush1.bf16.msra.mxu0 %v1956
    %2267 = vmatprep.subr.bf16.mxu0 %v1964
    %2268 = vmatpush1.bf16.msra.mxu0 %v1963
    %2269 = vmatprep.mubr.bf16.mxu0 %v748
    %2270 = vmatmul.mubr.bf16.gmra.mrb[0].mxu0 %v747
    %v2271 = vpop.f32.mrb[0].mxu0
    %v2272 = vadd.f32 %v2229, %v2271
    %v2273 = vpop.f32.mrb[0].mxu0
    %v2274 = vadd.f32 %v2231, %v2273
    %v2275 = vpop.f32.mrb[0].mxu0
    %v2276 = vadd.f32 %v2233, %v2275
    %v2277 = vpop.f32.mrb[0].mxu0
    %v2278 = vadd.f32 %v2235, %v2277
    %2279 = vdwg.mxu0
    %2280 = vmatprep.subr.bf16.mxu0 %v1749
    %2281 = vmatpush1.bf16.msra.mxu0 %v1748
    %2282 = vmatprep.subr.bf16.mxu0 %v1756
    %2283 = vmatpush1.bf16.msra.mxu0 %v1755
    %2284 = vmatprep.subr.bf16.mxu0 %v1763
    %2285 = vmatpush1.bf16.msra.mxu0 %v1762
    %2286 = vmatprep.subr.bf16.mxu0 %v1770
    %2287 = vmatpush1.bf16.msra.mxu0 %v1769
    %2288 = vmatprep.subr.bf16.mxu0 %v1777
    %2289 = vmatpush1.bf16.msra.mxu0 %v1776
    %2290 = vmatprep.subr.bf16.mxu0 %v1784
    %2291 = vmatpush1.bf16.msra.mxu0 %v1783
    %2292 = vmatprep.subr.bf16.mxu0 %v1791
    %2293 = vmatpush1.bf16.msra.mxu0 %v1790
    %2294 = vmatprep.subr.bf16.mxu0 %v1798
    %2295 = vmatpush1.bf16.msra.mxu0 %v1797
    %2296 = vmatprep.subr.bf16.mxu0 %v1805
    %2297 = vmatpush1.bf16.msra.mxu0 %v1804
    %2298 = vmatprep.subr.bf16.mxu0 %v1812
    %2299 = vmatpush1.bf16.msra.mxu0 %v1811
    %2300 = vmatprep.subr.bf16.mxu0 %v1819
    %2301 = vmatpush1.bf16.msra.mxu0 %v1818
    %2302 = vmatprep.subr.bf16.mxu0 %v1826
    %2303 = vmatpush1.bf16.msra.mxu0 %v1825
    %2304 = vmatprep.subr.bf16.mxu0 %v1833
    %2305 = vmatpush1.bf16.msra.mxu0 %v1832
    %2306 = vmatprep.subr.bf16.mxu0 %v1840
    %2307 = vmatpush1.bf16.msra.mxu0 %v1839
    %2308 = vmatprep.subr.bf16.mxu0 %v1847
    %2309 = vmatpush1.bf16.msra.mxu0 %v1846
    %2310 = vmatprep.subr.bf16.mxu0 %v1854
    %2311 = vmatpush1.bf16.msra.mxu0 %v1853
    %2312 = vmatprep.mubr.bf16.mxu0 %v746
    %2313 = vmatmul.mubr.bf16.gmra.mrb[0].mxu0 %v745
    %v2314 = vpop.f32.mrb[0].mxu0
    %v2315 = vadd.f32 %v1018, %v2314
    %v2316 = vpop.f32.mrb[0].mxu0
    %v2317 = vadd.f32 %v1022, %v2316
    %v2318 = vpop.f32.mrb[0].mxu0
    %v2319 = vadd.f32 %v1018, %v2318
    %v2320 = vpop.f32.mrb[0].mxu0
    %v2321 = vadd.f32 %v1022, %v2320
    %2322 = vdwg.mxu0
    %2323 = vmatprep.subr.bf16.mxu0 %v1861
    %2324 = vmatpush1.bf16.msra.mxu0 %v1860
    %2325 = vmatprep.subr.bf16.mxu0 %v1868
    %2326 = vmatpush1.bf16.msra.mxu0 %v1867
    %2327 = vmatprep.subr.bf16.mxu0 %v1875
    %2328 = vmatpush1.bf16.msra.mxu0 %v1874
    %2329 = vmatprep.subr.bf16.mxu0 %v1882
    %2330 = vmatpush1.bf16.msra.mxu0 %v1881
    %2331 = vmatprep.subr.bf16.mxu0 %v1889
    %2332 = vmatpush1.bf16.msra.mxu0 %v1888
    %2333 = vmatprep.subr.bf16.mxu0 %v1896
    %2334 = vmatpush1.bf16.msra.mxu0 %v1895
    %2335 = vmatprep.subr.bf16.mxu0 %v1903
    %2336 = vmatpush1.bf16.msra.mxu0 %v1902
    %2337 = vmatprep.subr.bf16.mxu0 %v1910
    %2338 = vmatpush1.bf16.msra.mxu0 %v1909
    %2339 = vmatprep.subr.bf16.mxu0 %v1917
    %2340 = vmatpush1.bf16.msra.mxu0 %v1916
    %2341 = vmatprep.subr.bf16.mxu0 %v1924
    %2342 = vmatpush1.bf16.msra.mxu0 %v1923
    %2343 = vmatprep.subr.bf16.mxu0 %v1931
    %2344 = vmatpush1.bf16.msra.mxu0 %v1930
    %2345 = vmatprep.subr.bf16.mxu0 %v1938
    %2346 = vmatpush1.bf16.msra.mxu0 %v1937
    %2347 = vmatprep.subr.bf16.mxu0 %v1945
    %2348 = vmatpush1.bf16.msra.mxu0 %v1944
    %2349 = vmatprep.subr.bf16.mxu0 %v1952
    %2350 = vmatpush1.bf16.msra.mxu0 %v1951
    %2351 = vmatprep.subr.bf16.mxu0 %v1959
    %2352 = vmatpush1.bf16.msra.mxu0 %v1958
    %2353 = vmatprep.subr.bf16.mxu0 %v1966
    %2354 = vmatpush1.bf16.msra.mxu0 %v1965
    %2355 = vmatprep.mubr.bf16.mxu0 %v748
    %2356 = vmatmul.mubr.bf16.gmra.mrb[0].mxu0 %v747
    %v2357 = vpop.f32.mrb[0].mxu0
    %v2358 = vadd.f32 %v2315, %v2357
    %v2359 = vpop.f32.mrb[0].mxu0
    %v2360 = vadd.f32 %v2317, %v2359
    %v2361 = vpop.f32.mrb[0].mxu0
    %v2362 = vadd.f32 %v2319, %v2361
    %v2363 = vpop.f32.mrb[0].mxu0
    %v2364 = vadd.f32 %v2321, %v2363
    %2365 = vdwg.mxu0
    %2366 = vmatprep.subr.bf16.mxu0 %v1751
    %2367 = vmatpush1.bf16.msra.mxu0 %v1750
    %2368 = vmatprep.subr.bf16.mxu0 %v1758
    %2369 = vmatpush1.bf16.msra.mxu0 %v1757
    %2370 = vmatprep.subr.bf16.mxu0 %v1765
    %2371 = vmatpush1.bf16.msra.mxu0 %v1764
    %2372 = vmatprep.subr.bf16.mxu0 %v1772
    %2373 = vmatpush1.bf16.msra.mxu0 %v1771
    %2374 = vmatprep.subr.bf16.mxu0 %v1779
    %2375 = vmatpush1.bf16.msra.mxu0 %v1778
    %2376 = vmatprep.subr.bf16.mxu0 %v1786
    %2377 = vmatpush1.bf16.msra.mxu0 %v1785
    %2378 = vmatprep.subr.bf16.mxu0 %v1793
    %2379 = vmatpush1.bf16.msra.mxu0 %v1792
    %2380 = vmatprep.subr.bf16.mxu0 %v1800
    %2381 = vmatpush1.bf16.msra.mxu0 %v1799
    %2382 = vmatprep.subr.bf16.mxu0 %v1807
    %2383 = vmatpush1.bf16.msra.mxu0 %v1806
    %2384 = vmatprep.subr.bf16.mxu0 %v1814
    %2385 = vmatpush1.bf16.msra.mxu0 %v1813
    %2386 = vmatprep.subr.bf16.mxu0 %v1821
    %2387 = vmatpush1.bf16.msra.mxu0 %v1820
    %2388 = vmatprep.subr.bf16.mxu0 %v1828
    %2389 = vmatpush1.bf16.msra.mxu0 %v1827
    %2390 = vmatprep.subr.bf16.mxu0 %v1835
    %2391 = vmatpush1.bf16.msra.mxu0 %v1834
    %2392 = vmatprep.subr.bf16.mxu0 %v1842
    %2393 = vmatpush1.bf16.msra.mxu0 %v1841
    %2394 = vmatprep.subr.bf16.mxu0 %v1849
    %2395 = vmatpush1.bf16.msra.mxu0 %v1848
    %2396 = vmatprep.subr.bf16.mxu0 %v1856
    %2397 = vmatpush1.bf16.msra.mxu0 %v1855
    %2398 = vmatprep.mubr.bf16.mxu0 %v746
    %2399 = vmatmul.mubr.bf16.gmra.mrb[0].mxu0 %v745
    %v2400 = vpop.f32.mrb[0].mxu0
    %v2401 = vadd.f32 %v1026, %v2400
    %v2402 = vpop.f32.mrb[0].mxu0
    %v2403 = vadd.f32 %v1030, %v2402
    %v2404 = vpop.f32.mrb[0].mxu0
    %v2405 = vadd.f32 %v1026, %v2404
    %v2406 = vpop.f32.mrb[0].mxu0
    %v2407 = vadd.f32 %v1030, %v2406
    %2408 = vdwg.mxu0
    %2409 = vmatprep.subr.bf16.mxu0 %v1863
    %2410 = vmatpush1.bf16.msra.mxu0 %v1862
    %2411 = vmatprep.subr.bf16.mxu0 %v1870
    %2412 = vmatpush1.bf16.msra.mxu0 %v1869
    %2413 = vmatprep.subr.bf16.mxu0 %v1877
    %2414 = vmatpush1.bf16.msra.mxu0 %v1876
    %2415 = vmatprep.subr.bf16.mxu0 %v1884
    %2416 = vmatpush1.bf16.msra.mxu0 %v1883
    %2417 = vmatprep.subr.bf16.mxu0 %v1891
    %2418 = vmatpush1.bf16.msra.mxu0 %v1890
    %2419 = vmatprep.subr.bf16.mxu0 %v1898
    %2420 = vmatpush1.bf16.msra.mxu0 %v1897
    %2421 = vmatprep.subr.bf16.mxu0 %v1905
    %2422 = vmatpush1.bf16.msra.mxu0 %v1904
    %2423 = vmatprep.subr.bf16.mxu0 %v1912
    %2424 = vmatpush1.bf16.msra.mxu0 %v1911
    %2425 = vmatprep.subr.bf16.mxu0 %v1919
    %2426 = vmatpush1.bf16.msra.mxu0 %v1918
    %2427 = vmatprep.subr.bf16.mxu0 %v1926
    %2428 = vmatpush1.bf16.msra.mxu0 %v1925
    %2429 = vmatprep.subr.bf16.mxu0 %v1933
    %2430 = vmatpush1.bf16.msra.mxu0 %v1932
    %2431 = vmatprep.subr.bf16.mxu0 %v1940
    %2432 = vmatpush1.bf16.msra.mxu0 %v1939
    %2433 = vmatprep.subr.bf16.mxu0 %v1947
    %2434 = vmatpush1.bf16.msra.mxu0 %v1946
    %2435 = vmatprep.subr.bf16.mxu0 %v1954
    %2436 = vmatpush1.bf16.msra.mxu0 %v1953
    %2437 = vmatprep.subr.bf16.mxu0 %v1961
    %2438 = vmatpush1.bf16.msra.mxu0 %v1960
    %2439 = vmatprep.subr.bf16.mxu0 %v1968
    %2440 = vmatpush1.bf16.msra.mxu0 %v1967
    %2441 = vmatprep.mubr.bf16.mxu0 %v748
    %2442 = vmatmul.mubr.bf16.gmra.mrb[0].mxu0 %v747
    %v2443 = vpop.f32.mrb[0].mxu0
    %v2444 = vadd.f32 %v2401, %v2443
    %v2445 = vpop.f32.mrb[0].mxu0
    %v2446 = vadd.f32 %v2403, %v2445
    %v2447 = vpop.f32.mrb[0].mxu0
    %v2448 = vadd.f32 %v2405, %v2447
    %v2449 = vpop.f32.mrb[0].mxu0
    %v2450 = vadd.f32 %v2407, %v2449
    %2451 = vdwg.mxu0
    %2452 = vmatprep.subr.bf16.mxu0 0
    %2453 = vmatpush1.bf16.msra.mxu0 %v1752
    %2454 = vmatprep.subr.bf16.mxu0 0
    %2455 = vmatpush1.bf16.msra.mxu0 %v1759
    %2456 = vmatprep.subr.bf16.mxu0 0
    %2457 = vmatpush1.bf16.msra.mxu0 %v1766
    %2458 = vmatprep.subr.bf16.mxu0 0
    %2459 = vmatpush1.bf16.msra.mxu0 %v1773
    %2460 = vmatprep.subr.bf16.mxu0 0
    %2461 = vmatpush1.bf16.msra.mxu0 %v1780
    %2462 = vmatprep.subr.bf16.mxu0 0
    %2463 = vmatpush1.bf16.msra.mxu0 %v1787
    %2464 = vmatprep.subr.bf16.mxu0 0
    %2465 = vmatpush1.bf16.msra.mxu0 %v1794
    %2466 = vmatprep.subr.bf16.mxu0 0
    %2467 = vmatpush1.bf16.msra.mxu0 %v1801
    %2468 = vmatprep.subr.bf16.mxu0 0
    %2469 = vmatpush1.bf16.msra.mxu0 %v1808
    %2470 = vmatprep.subr.bf16.mxu0 0
    %2471 = vmatpush1.bf16.msra.mxu0 %v1815
    %2472 = vmatprep.subr.bf16.mxu0 0
    %2473 = vmatpush1.bf16.msra.mxu0 %v1822
    %2474 = vmatprep.subr.bf16.mxu0 0
    %2475 = vmatpush1.bf16.msra.mxu0 %v1829
    %2476 = vmatprep.subr.bf16.mxu0 0
    %2477 = vmatpush1.bf16.msra.mxu0 %v1836
    %2478 = vmatprep.subr.bf16.mxu0 0
    %2479 = vmatpush1.bf16.msra.mxu0 %v1843
    %2480 = vmatprep.subr.bf16.mxu0 0
    %2481 = vmatpush1.bf16.msra.mxu0 %v1850
    %2482 = vmatprep.subr.bf16.mxu0 0
    %2483 = vmatpush1.bf16.msra.mxu0 %v1857
    %2484 = vmatprep.mubr.bf16.mxu0 %v746
    %2485 = vmatmul.mubr.bf16.gmra.mrb[0].mxu0 %v745
    %v2486 = vpop.f32.mrb[0].mxu0
    %v2487 = vadd.f32 %v1034, %v2486
    %v2488 = vpop.f32.mrb[0].mxu0
    %v2489 = vpop.f32.mrb[0].mxu0
    %v2490 = vadd.f32 %v1034, %v2489
    %v2491 = vpop.f32.mrb[0].mxu0
    %2492 = vdwg.mxu0
    %2493 = vmatprep.subr.bf16.mxu0 0
    %2494 = vmatpush1.bf16.msra.mxu0 %v1864
    %2495 = vmatprep.subr.bf16.mxu0 0
    %2496 = vmatpush1.bf16.msra.mxu0 %v1871
    %2497 = vmatprep.subr.bf16.mxu0 0
    %2498 = vmatpush1.bf16.msra.mxu0 %v1878
    %2499 = vmatprep.subr.bf16.mxu0 0
    %2500 = vmatpush1.bf16.msra.mxu0 %v1885
    %2501 = vmatprep.subr.bf16.mxu0 0
    %2502 = vmatpush1.bf16.msra.mxu0 %v1892
    %2503 = vmatprep.subr.bf16.mxu0 0
    %2504 = vmatpush1.bf16.msra.mxu0 %v1899
    %2505 = vmatprep.subr.bf16.mxu0 0
    %2506 = vmatpush1.bf16.msra.mxu0 %v1906
    %2507 = vmatprep.subr.bf16.mxu0 0
    %2508 = vmatpush1.bf16.msra.mxu0 %v1913
    %2509 = vmatprep.subr.bf16.mxu0 0
    %2510 = vmatpush1.bf16.msra.mxu0 %v1920
    %2511 = vmatprep.subr.bf16.mxu0 0
    %2512 = vmatpush1.bf16.msra.mxu0 %v1927
    %2513 = vmatprep.subr.bf16.mxu0 0
    %2514 = vmatpush1.bf16.msra.mxu0 %v1934
    %2515 = vmatprep.subr.bf16.mxu0 0
    %2516 = vmatpush1.bf16.msra.mxu0 %v1941
    %2517 = vmatprep.subr.bf16.mxu0 0
    %2518 = vmatpush1.bf16.msra.mxu0 %v1948
    %2519 = vmatprep.subr.bf16.mxu0 0
    %2520 = vmatpush1.bf16.msra.mxu0 %v1955
    %2521 = vmatprep.subr.bf16.mxu0 0
    %2522 = vmatpush1.bf16.msra.mxu0 %v1962
    %2523 = vmatprep.subr.bf16.mxu0 0
    %2524 = vmatpush1.bf16.msra.mxu0 %v1969
    %2525 = vmatprep.mubr.bf16.mxu0 %v748
    %2526 = vmatmul.mubr.bf16.gmra.mrb[0].mxu0 %v747
    %v2527 = vpop.f32.mrb[0].mxu0
    %v2528 = vadd.f32 %v2487, %v2527
    %v2529 = vpop.f32.mrb[0].mxu0
    %v2530 = vpop.f32.mrb[0].mxu0
    %v2531 = vadd.f32 %v2490, %v2530
    %v2532 = vpop.f32.mrb[0].mxu0
    %2533 = vdwg.mxu0
    %v2534 = vtanh.pop %v2272
    %v2535 = vtanh.pop %v2274
    %v2536 = vtanh.pop %v2358
    %v2537 = vtanh.pop %v2360
    %v2538 = vtanh.pop %v2444
    %v2539 = vtanh.pop %v2446
    %v2540 = vtanh.pop %v2528
    %v2541 = vtanh.pop %v2276
    %v2542 = vtanh.pop %v2278
    %v2543 = vtanh.pop %v2362
    %v2544 = vtanh.pop %v2364
    %v2545 = vtanh.pop %v2448
    %v2546 = vtanh.pop %v2450
    %v2547 = vtanh.pop %v2531
    %2548 = vst [vmem:[%s7] sm:$0xff] %v2534
    %2549 = vst [vmem:[%s7 + $0x8] sm:$0xff] %v2535
    %2550 = vst [vmem:[%s7 + $0x10] sm:$0xff] %v2536
    %2551 = vst [vmem:[%s7 + $0x18] sm:$0xff] %v2537
    %2552 = vst [vmem:[%s7 + $0x20] sm:$0xff] %v2538
    %2553 = vst [vmem:[%s7 + $0x28] sm:$0xff] %v2539
    %2554 = vst [vmem:[%s7 + $0x30] sm:$0xff] %v2540
    %2555 = vst [vmem:[%s7 + $0x38] sm:$0xff] %v2541
    %2556 = vst [vmem:[%s7 + $0x40] sm:$0xff] %v2542
    %2557 = vst [vmem:[%s7 + $0x48] sm:$0xff] %v2543
    %2558 = vst [vmem:[%s7 + $0x50] sm:$0xff] %v2544
    %2559 = vst [vmem:[%s7 + $0x58] sm:$0xff] %v2545
    %2560 = vst [vmem:[%s7 + $0x60] sm:$0xff] %v2546
    %2561 = vst [vmem:[%s7 + $0x68] sm:$0xff] %v2547
    // Predicated region
    $region42: #{generator_forward.1} parent=1 // pred_check
      _
    $region43: #{generator_forward.1} parent=1 // pred_check_branch
      %2563 = sbr.rel (0) target = $region45
    $region44: #{generator_forward.1} parent=1 // pred_region
      _
    $region45: #{generator_forward.1} parent=1 // pred_fallthru
      _
    // Predicated region
    $region46: #{generator_forward.1} parent=1 // pred_check
      _
    $region47: #{generator_forward.1} parent=1 // pred_check_branch
      %2565 = sbr.rel (0) target = $region49
    $region48: #{generator_forward.1} parent=1 // pred_region
      _
    $region49: #{generator_forward.1} parent=1 // pred_fallthru
      _
    %2566 = vsyncpa [#allocation3], 1
    %2567 = vsyncpa [#allocation5], 1

</llo_original>
